<compile_context>
chip_gen: v7x
topology: tpu7x:2x2x1
jax: 0.10.0
libtpu: 0.0.40
codegen_flags: <defaults>
</compile_context>

<pallas_src>
import math

import jax
import jax.numpy as jnp
from jax.experimental import pallas as pl
from jax.experimental.pallas import tpu as pltpu

BN_EPS = 1e-5


# ----------------------------------------------------------------------------
# Fused kernel: one invocation == whole forward (both branches unrolled)
# ----------------------------------------------------------------------------
def fused_forward_kernel(xT_ref,
                         wqkv_ref, bqkv_ref, wo_ref, bo_ref,
                         w1_ref, b1_ref, w2_ref, b2_ref,
                         w3_ref, b3_ref, w4_ref, b4_ref,
                         out_ref):
    D, _ = xT_ref.shape          # features on sublanes, batch on lanes
    L = w2_ref.shape[0]

    xT = xT_ref[...]                                                    # (D, B)

    # --- fused Q/K/V for BOTH selector branches: one MXU matmul ---------------
    qkv = jnp.dot(wqkv_ref[...], xT,
                  preferred_element_type=jnp.float32) + bqkv_ref[...]  # (6D, B)

    for br in range(2):                       # unrolled; no grid, no cross-TC split
        off = br * 3 * D
        qT = qkv[off:off + D]                                           # (S, B)
        kT = qkv[off + D:off + 2 * D]                                   # (S, B)
        vT = qkv[off + 2 * D:off + 3 * D]                               # (S, B)

        # scores[j, i, b] = q[b, i] * k[b, j]; softmax over key axis j, which is
        # the LEADING axis -> reductions are plain elementwise VPU ops over vreg
        # groups, batch stays dense in lanes, no (B, S, S) vreg blow-up.
        scores = kT[:, None, :] * qT[None, :, :]                        # (S, S, B)
        m = jnp.max(scores, axis=0, keepdims=True)
        e = jnp.exp(scores - m)
        denom = jnp.sum(e, axis=0, keepdims=True)
        attn = e * pl.reciprocal(denom, approx=True)                    # EUP divide
        aoT = jnp.sum(attn * vT[:, None, :], axis=0)                    # (S, B)

        wo = wo_ref[br * D:(br + 1) * D, :]                             # (D, D)
        bo = bo_ref[br * D:(br + 1) * D, :]                             # (D, 1)
        xfT = jnp.dot(wo, aoT, preferred_element_type=jnp.float32) + bo # (D, B)

        # --- encoder (+ batch_norm2); eval-mode BN folded into w1/b1, w2/b2 ----
        h = jnp.dot(w1_ref[...], xfT,
                    preferred_element_type=jnp.float32) + b1_ref[...]   # (H1, B)
        h = jnp.maximum(h, 0.0)                     # Dropout = identity (eval)
        zT = jnp.dot(w2_ref[...], h,
                     preferred_element_type=jnp.float32) + b2_ref[...]  # (L, B)

        # --- predictor ----------------------------------------------------------
        hp = jnp.dot(w3_ref[...], zT,
                     preferred_element_type=jnp.float32) + b3_ref[...]  # (H2, B)
        hp = jnp.maximum(hp, 0.0)
        pT = jnp.dot(w4_ref[...], hp,
                     preferred_element_type=jnp.float32) + b4_ref[...]  # (L, B)

        # Single lane-dense output slab: rows [0:L] = p, rows [L:2L] = z.
        out_ref[br, :L, :] = pT
        out_ref[br, L:, :] = zT


# ----------------------------------------------------------------------------
# Single, gridless pallas_call wrapper
# ----------------------------------------------------------------------------
def autoencoder_forward(kp, x):
    B, _ = x.shape
    L = kp["w2"].shape[0]

    vmem_spec = pl.BlockSpec(memory_space=pltpu.MemorySpace.VMEM)
    args = (x.T,                                    # (D, B): batch-in-lanes layout
            kp["wqkv"], kp["bqkv"], kp["wo"], kp["bo"],
            kp["w1"], kp["b1"], kp["w2"], kp["b2"],
            kp["w3"], kp["b3"], kp["w4"], kp["b4"])

    out = pl.pallas_call(
        fused_forward_kernel,
        in_specs=[vmem_spec] * len(args),           # whole arrays, no pipelining /
        out_specs=vmem_spec,                        # double-buffering of constants
        out_shape=jax.ShapeDtypeStruct((2, 2 * L, B), jnp.float32),
    )(*args)

    # Host-side layout plumbing only (split + transpose of a tiny slab).
    p1, z1 = out[0, :L, :].T, out[0, L:, :].T
    p2, z2 = out[1, :L, :].T, out[1, L:, :].T
    return p1, p2, jax.lax.stop_gradient(z1), jax.lax.stop_gradient(z2)


# ----------------------------------------------------------------------------
# Parameter construction (PyTorch-style layout) + host-side kernel preparation
# ----------------------------------------------------------------------------
def _init_linear(key, out_dim, in_dim):
    kw, kb = jax.random.split(key)
    bound = 1.0 / math.sqrt(in_dim)
    w = jax.random.uniform(kw, (out_dim, in_dim), jnp.float32, -bound, bound)
    b = jax.random.uniform(kb, (out_dim,), jnp.float32, -bound, bound)
    return w, b


def _init_bn(key, dim):
    # Non-trivial gamma/beta/running stats so the eval-mode BN fold is actually tested.
    kg, kb, km, kv = jax.random.split(key, 4)
    return dict(
        g=jax.random.uniform(kg, (dim,), jnp.float32, 0.5, 1.5),
        b=0.1 * jax.random.normal(kb, (dim,), jnp.float32),
        mean=0.1 * jax.random.normal(km, (dim,), jnp.float32),
        var=jax.random.uniform(kv, (dim,), jnp.float32, 0.5, 1.5),
    )


def init_raw_params(key, input_dim, latent_dim):
    keys = jax.random.split(key, 14)
    raw = {}
    for name, base in (("fs1", 0), ("fs2", 4)):
        sel = {}
        for j, lin in enumerate(("q", "k", "v", "o")):
            w, b = _init_linear(keys[base + j], input_dim, input_dim)
            sel["w" + lin], sel["b" + lin] = w, b
        raw[name] = sel
    raw["enc_w1"], raw["enc_b1"] = _init_linear(keys[8], input_dim * 5, input_dim)
    raw["bn1"] = _init_bn(keys[9], input_dim * 5)
    raw["enc_w2"], raw["enc_b2"] = _init_linear(keys[10], latent_dim, input_dim * 5)
    raw["bn2"] = _init_bn(keys[11], latent_dim)
    raw["pred_w1"], raw["pred_b1"] = _init_linear(keys[12], latent_dim * 5, latent_dim)
    raw["pred_w2"], raw["pred_b2"] = _init_linear(keys[13], latent_dim, latent_dim * 5)
    return raw


def prepare_kernel_params(raw):
    """Host-side, one-time transform into the kernel-ready layout:
       * Q/K/V weights of BOTH branches concatenated into one (6D, D) weight,
       * output-projection weights of both branches stacked into (2D, D),
       * all weights kept in PyTorch (out, in) layout (kernel computes W @ xT),
       * biases as (out, 1) columns,
       * eval-mode BatchNorm folded exactly into the adjacent Linear."""
    def fold(w, b, bn):                         # w: (out, in) PyTorch layout
        scale = bn["g"] / jnp.sqrt(bn["var"] + BN_EPS)
        return w * scale[:, None], ((b - bn["mean"]) * scale + bn["b"])[:, None]

    f1, f2 = raw["fs1"], raw["fs2"]
    kp = {}
    kp["wqkv"] = jnp.concatenate(
        [f1["wq"], f1["wk"], f1["wv"], f2["wq"], f2["wk"], f2["wv"]], axis=0)
    kp["bqkv"] = jnp.concatenate(
        [f1["bq"], f1["bk"], f1["bv"], f2["bq"], f2["bk"], f2["bv"]], axis=0)[:, None]
    kp["wo"] = jnp.concatenate([f1["wo"], f2["wo"]], axis=0)
    kp["bo"] = jnp.concatenate([f1["bo"], f2["bo"]], axis=0)[:, None]
    kp["w1"], kp["b1"] = fold(raw["enc_w1"], raw["enc_b1"], raw["bn1"])
    kp["w2"], kp["b2"] = fold(raw["enc_w2"], raw["enc_b2"], raw["bn2"])
    kp["w3"], kp["b3"] = raw["pred_w1"], raw["pred_b1"][:, None]
    kp["w4"], kp["b4"] = raw["pred_w2"], raw["pred_b2"][:, None]
    return kp


# ----------------------------------------------------------------------------
# Pure-JAX reference (PyTorch semantics, uses the un-transformed params)
# ----------------------------------------------------------------------------
def _ref_forward(raw, x):
    def lin(x, w, b):
        return x @ w.T + b

    def bn(x, p):
        return (x - p["mean"]) / jnp.sqrt(p["var"] + BN_EPS) * p["g"] + p["b"]

    def fs(sel, x):
        q = lin(x, sel["wq"], sel["bq"])
        k = lin(x, sel["wk"], sel["bk"])
        v = lin(x, sel["wv"], sel["bv"])
        attn = jax.nn.softmax(q[:, :, None] * k[:, None, :], axis=-1)
        ao = jnp.sum(attn * v[:, None, :], axis=-1)
        return lin(ao, sel["wo"], sel["bo"])

    def enc(x):
        h = jnp.maximum(bn(lin(x, raw["enc_w1"], raw["enc_b1"]), raw["bn1"]), 0.0)
        return bn(lin(h, raw["enc_w2"], raw["enc_b2"]), raw["bn2"])

    def pred(z):
        h = jnp.maximum(lin(z, raw["pred_w1"], raw["pred_b1"]), 0.0)
        return lin(h, raw["pred_w2"], raw["pred_b2"])

    x1, x2 = fs(raw["fs1"], x), fs(raw["fs2"], x)
    z1, z2 = enc(x1), enc(x2)
    return pred(z1), pred(z2), z1, z2


# ----------------------------------------------------------------------------
if __name__ == "__main__":
    BATCH = 64        # batch lives on the lane axis inside the kernel
    INPUT_DIM = 16    # doubles as seq_len inside SelfAttentionSelector
    LATENT_DIM = 8

    key = jax.random.PRNGKey(0)
    k_param, k_x = jax.random.split(key)
    raw = init_raw_params(k_param, INPUT_DIM, LATENT_DIM)
    kparams = prepare_kernel_params(raw)
    x = jax.random.normal(k_x, (BATCH, INPUT_DIM), jnp.float32)

    p1, p2, z1, z2 = autoencoder_forward(kparams, x)
    jax.block_until_ready((p1, p2, z1, z2))

    r1, r2, rz1, rz2 = _ref_forward(raw, x)
    # Slightly looser tolerance because of the approximate EUP reciprocal in softmax.
    for got, want in ((p1, r1), (p2, r2), (z1, rz1), (z2, rz2)):
        assert jnp.allclose(got, want, rtol=2e-3, atol=2e-3), \
            float(jnp.max(jnp.abs(got - want)))

    print("KERNEL_OK")
</pallas_src>

<mosaic_0001>
module attributes {stable_mosaic.version = 11 : i64} {
  func.func @fused_forward_kernel(%arg0: memref<16x64xf32, #tpu.memory_space<vmem>>, %arg1: memref<96x16xf32, #tpu.memory_space<vmem>>, %arg2: memref<96x1xf32, #tpu.memory_space<vmem>>, %arg3: memref<32x16xf32, #tpu.memory_space<vmem>>, %arg4: memref<32x1xf32, #tpu.memory_space<vmem>>, %arg5: memref<80x16xf32, #tpu.memory_space<vmem>>, %arg6: memref<80x1xf32, #tpu.memory_space<vmem>>, %arg7: memref<8x80xf32, #tpu.memory_space<vmem>>, %arg8: memref<8x1xf32, #tpu.memory_space<vmem>>, %arg9: memref<40x8xf32, #tpu.memory_space<vmem>>, %arg10: memref<40x1xf32, #tpu.memory_space<vmem>>, %arg11: memref<8x40xf32, #tpu.memory_space<vmem>>, %arg12: memref<8x1xf32, #tpu.memory_space<vmem>>, %arg13: memref<2x16x64xf32, #tpu.memory_space<vmem>>) attributes {dimension_semantics = [], scalar_prefetch = 0 : i64, scratch_operands = 0 : i64, tpu.core_type = #tpu.core_type<tc>} {
    %c0 = arith.constant 0 : index
    %c0_0 = arith.constant 0 : index
    %0 = vector.load %arg0[%c0, %c0_0] : memref<16x64xf32, #tpu.memory_space<vmem>>, vector<16x64xf32>
    %c0_1 = arith.constant 0 : index
    %c0_2 = arith.constant 0 : index
    %1 = vector.load %arg1[%c0_1, %c0_2] : memref<96x16xf32, #tpu.memory_space<vmem>>, vector<96x16xf32>
    %cst = arith.constant dense<0.000000e+00> : vector<96x64xf32>
    %2 = tpu.matmul %1, %0, %cst {dimension_numbers = #tpu.dot_dimension_numbers<[1], [0], [0], [1], [0, 0, 1, 1], [], []>} : vector<96x16xf32>, vector<16x64xf32>, vector<96x64xf32> -> vector<96x64xf32>
    %c0_3 = arith.constant 0 : index
    %c0_4 = arith.constant 0 : index
    %3 = vector.load %arg2[%c0_3, %c0_4] : memref<96x1xf32, #tpu.memory_space<vmem>>, vector<96x1xf32>
    %4 = vector.broadcast %3 : vector<96x1xf32> to vector<96x64xf32>
    %5 = arith.addf %2, %4 : vector<96x64xf32>
    %6 = vector.extract_strided_slice %5 {offsets = [0, 0], sizes = [16, 64], strides = [1, 1]} : vector<96x64xf32> to vector<16x64xf32>
    %7 = vector.extract_strided_slice %5 {offsets = [16, 0], sizes = [16, 64], strides = [1, 1]} : vector<96x64xf32> to vector<16x64xf32>
    %8 = vector.extract_strided_slice %5 {offsets = [32, 0], sizes = [16, 64], strides = [1, 1]} : vector<96x64xf32> to vector<16x64xf32>
    %9 = vector.shape_cast %7 : vector<16x64xf32> to vector<16x1x64xf32>
    %10 = vector.shape_cast %6 : vector<16x64xf32> to vector<1x16x64xf32>
    %11 = vector.broadcast %9 : vector<16x1x64xf32> to vector<16x16x64xf32>
    %12 = vector.broadcast %10 : vector<1x16x64xf32> to vector<16x16x64xf32>
    %13 = arith.mulf %11, %12 : vector<16x16x64xf32>
    %cst_5 = arith.constant dense<0xFF800000> : vector<16x64xf32>
    %14 = vector.multi_reduction <maximumf>, %13, %cst_5 [0] : vector<16x16x64xf32> to vector<16x64xf32>
    %15 = vector.shape_cast %14 : vector<16x64xf32> to vector<1x16x64xf32>
    %16 = vector.broadcast %15 : vector<1x16x64xf32> to vector<16x16x64xf32>
    %17 = arith.subf %13, %16 : vector<16x16x64xf32>
    %18 = math.exp %17 : vector<16x16x64xf32>
    %cst_6 = arith.constant dense<0.000000e+00> : vector<16x64xf32>
    %19 = vector.multi_reduction <add>, %18, %cst_6 [0] : vector<16x16x64xf32> to vector<16x64xf32>
    %20 = vector.shape_cast %19 : vector<16x64xf32> to vector<1x16x64xf32>
    %21 = tpu.reciprocal %20 {approx = true} : vector<1x16x64xf32> -> vector<1x16x64xf32>
    %22 = vector.broadcast %21 : vector<1x16x64xf32> to vector<16x16x64xf32>
    %23 = arith.mulf %18, %22 : vector<16x16x64xf32>
    %24 = vector.shape_cast %8 : vector<16x64xf32> to vector<16x1x64xf32>
    %25 = vector.broadcast %24 : vector<16x1x64xf32> to vector<16x16x64xf32>
    %26 = arith.mulf %23, %25 : vector<16x16x64xf32>
    %cst_7 = arith.constant dense<0.000000e+00> : vector<16x64xf32>
    %27 = vector.multi_reduction <add>, %26, %cst_7 [0] : vector<16x16x64xf32> to vector<16x64xf32>
    %c0_8 = arith.constant 0 : index
    %c0_9 = arith.constant 0 : index
    %28 = vector.load %arg3[%c0_8, %c0_9] : memref<32x16xf32, #tpu.memory_space<vmem>>, vector<16x16xf32>
    %c0_10 = arith.constant 0 : index
    %c0_11 = arith.constant 0 : index
    %29 = vector.load %arg4[%c0_10, %c0_11] : memref<32x1xf32, #tpu.memory_space<vmem>>, vector<16x1xf32>
    %cst_12 = arith.constant dense<0.000000e+00> : vector<16x64xf32>
    %30 = tpu.matmul %28, %27, %cst_12 {dimension_numbers = #tpu.dot_dimension_numbers<[1], [0], [0], [1], [0, 0, 1, 1], [], []>} : vector<16x16xf32>, vector<16x64xf32>, vector<16x64xf32> -> vector<16x64xf32>
    %31 = vector.broadcast %29 : vector<16x1xf32> to vector<16x64xf32>
    %32 = arith.addf %30, %31 : vector<16x64xf32>
    %c0_13 = arith.constant 0 : index
    %c0_14 = arith.constant 0 : index
    %33 = vector.load %arg5[%c0_13, %c0_14] : memref<80x16xf32, #tpu.memory_space<vmem>>, vector<80x16xf32>
    %cst_15 = arith.constant dense<0.000000e+00> : vector<80x64xf32>
    %34 = tpu.matmul %33, %32, %cst_15 {dimension_numbers = #tpu.dot_dimension_numbers<[1], [0], [0], [1], [0, 0, 1, 1], [], []>} : vector<80x16xf32>, vector<16x64xf32>, vector<80x64xf32> -> vector<80x64xf32>
    %c0_16 = arith.constant 0 : index
    %c0_17 = arith.constant 0 : index
    %35 = vector.load %arg6[%c0_16, %c0_17] : memref<80x1xf32, #tpu.memory_space<vmem>>, vector<80x1xf32>
    %36 = vector.broadcast %35 : vector<80x1xf32> to vector<80x64xf32>
    %37 = arith.addf %34, %36 : vector<80x64xf32>
    %cst_18 = arith.constant 0.000000e+00 : f32
    %38 = vector.broadcast %cst_18 : f32 to vector<80x64xf32>
    %39 = arith.maximumf %37, %38 : vector<80x64xf32>
    %c0_19 = arith.constant 0 : index
    %c0_20 = arith.constant 0 : index
    %40 = vector.load %arg7[%c0_19, %c0_20] : memref<8x80xf32, #tpu.memory_space<vmem>>, vector<8x80xf32>
    %cst_21 = arith.constant dense<0.000000e+00> : vector<8x64xf32>
    %41 = tpu.matmul %40, %39, %cst_21 {dimension_numbers = #tpu.dot_dimension_numbers<[1], [0], [0], [1], [0, 0, 1, 1], [], []>} : vector<8x80xf32>, vector<80x64xf32>, vector<8x64xf32> -> vector<8x64xf32>
    %c0_22 = arith.constant 0 : index
    %c0_23 = arith.constant 0 : index
    %42 = vector.load %arg8[%c0_22, %c0_23] : memref<8x1xf32, #tpu.memory_space<vmem>>, vector<8x1xf32>
    %43 = vector.broadcast %42 : vector<8x1xf32> to vector<8x64xf32>
    %44 = arith.addf %41, %43 : vector<8x64xf32>
    %c0_24 = arith.constant 0 : index
    %c0_25 = arith.constant 0 : index
    %45 = vector.load %arg9[%c0_24, %c0_25] : memref<40x8xf32, #tpu.memory_space<vmem>>, vector<40x8xf32>
    %cst_26 = arith.constant dense<0.000000e+00> : vector<40x64xf32>
    %46 = tpu.matmul %45, %44, %cst_26 {dimension_numbers = #tpu.dot_dimension_numbers<[1], [0], [0], [1], [0, 0, 1, 1], [], []>} : vector<40x8xf32>, vector<8x64xf32>, vector<40x64xf32> -> vector<40x64xf32>
    %c0_27 = arith.constant 0 : index
    %c0_28 = arith.constant 0 : index
    %47 = vector.load %arg10[%c0_27, %c0_28] : memref<40x1xf32, #tpu.memory_space<vmem>>, vector<40x1xf32>
    %48 = vector.broadcast %47 : vector<40x1xf32> to vector<40x64xf32>
    %49 = arith.addf %46, %48 : vector<40x64xf32>
    %cst_29 = arith.constant 0.000000e+00 : f32
    %50 = vector.broadcast %cst_29 : f32 to vector<40x64xf32>
    %51 = arith.maximumf %49, %50 : vector<40x64xf32>
    %c0_30 = arith.constant 0 : index
    %c0_31 = arith.constant 0 : index
    %52 = vector.load %arg11[%c0_30, %c0_31] : memref<8x40xf32, #tpu.memory_space<vmem>>, vector<8x40xf32>
    %cst_32 = arith.constant dense<0.000000e+00> : vector<8x64xf32>
    %53 = tpu.matmul %52, %51, %cst_32 {dimension_numbers = #tpu.dot_dimension_numbers<[1], [0], [0], [1], [0, 0, 1, 1], [], []>} : vector<8x40xf32>, vector<40x64xf32>, vector<8x64xf32> -> vector<8x64xf32>
    %c0_33 = arith.constant 0 : index
    %c0_34 = arith.constant 0 : index
    %54 = vector.load %arg12[%c0_33, %c0_34] : memref<8x1xf32, #tpu.memory_space<vmem>>, vector<8x1xf32>
    %55 = vector.broadcast %54 : vector<8x1xf32> to vector<8x64xf32>
    %56 = arith.addf %53, %55 : vector<8x64xf32>
    %c0_35 = arith.constant 0 : index
    %c0_36 = arith.constant 0 : index
    %c0_37 = arith.constant 0 : index
    %57 = vector.load %arg13[%c0_35, %c0_36, %c0_37] : memref<2x16x64xf32, #tpu.memory_space<vmem>>, vector<1x8x64xf32>
    %58 = vector.shape_cast %57 : vector<1x8x64xf32> to vector<8x64xf32>
    %59 = vector.shape_cast %56 : vector<8x64xf32> to vector<1x8x64xf32>
    tpu.vector_store %arg13[%c0_35, %c0_36, %c0_37], %59 {strides = array<i32>} : memref<2x16x64xf32, #tpu.memory_space<vmem>>, vector<1x8x64xf32>,
    %c0_38 = arith.constant 0 : index
    %c8 = arith.constant 8 : index
    %c0_39 = arith.constant 0 : index
    %60 = vector.load %arg13[%c0_38, %c8, %c0_39] : memref<2x16x64xf32, #tpu.memory_space<vmem>>, vector<1x8x64xf32>
    %61 = vector.shape_cast %60 : vector<1x8x64xf32> to vector<8x64xf32>
    %62 = vector.shape_cast %44 : vector<8x64xf32> to vector<1x8x64xf32>
    tpu.vector_store %arg13[%c0_38, %c8, %c0_39], %62 {strides = array<i32>} : memref<2x16x64xf32, #tpu.memory_space<vmem>>, vector<1x8x64xf32>,
    %63 = vector.extract_strided_slice %5 {offsets = [48, 0], sizes = [16, 64], strides = [1, 1]} : vector<96x64xf32> to vector<16x64xf32>
    %64 = vector.extract_strided_slice %5 {offsets = [64, 0], sizes = [16, 64], strides = [1, 1]} : vector<96x64xf32> to vector<16x64xf32>
    %65 = vector.extract_strided_slice %5 {offsets = [80, 0], sizes = [16, 64], strides = [1, 1]} : vector<96x64xf32> to vector<16x64xf32>
    %66 = vector.shape_cast %64 : vector<16x64xf32> to vector<16x1x64xf32>
    %67 = vector.shape_cast %63 : vector<16x64xf32> to vector<1x16x64xf32>
    %68 = vector.broadcast %66 : vector<16x1x64xf32> to vector<16x16x64xf32>
    %69 = vector.broadcast %67 : vector<1x16x64xf32> to vector<16x16x64xf32>
    %70 = arith.mulf %68, %69 : vector<16x16x64xf32>
    %cst_40 = arith.constant dense<0xFF800000> : vector<16x64xf32>
    %71 = vector.multi_reduction <maximumf>, %70, %cst_40 [0] : vector<16x16x64xf32> to vector<16x64xf32>
    %72 = vector.shape_cast %71 : vector<16x64xf32> to vector<1x16x64xf32>
    %73 = vector.broadcast %72 : vector<1x16x64xf32> to vector<16x16x64xf32>
    %74 = arith.subf %70, %73 : vector<16x16x64xf32>
    %75 = math.exp %74 : vector<16x16x64xf32>
    %cst_41 = arith.constant dense<0.000000e+00> : vector<16x64xf32>
    %76 = vector.multi_reduction <add>, %75, %cst_41 [0] : vector<16x16x64xf32> to vector<16x64xf32>
    %77 = vector.shape_cast %76 : vector<16x64xf32> to vector<1x16x64xf32>
    %78 = tpu.reciprocal %77 {approx = true} : vector<1x16x64xf32> -> vector<1x16x64xf32>
    %79 = vector.broadcast %78 : vector<1x16x64xf32> to vector<16x16x64xf32>
    %80 = arith.mulf %75, %79 : vector<16x16x64xf32>
    %81 = vector.shape_cast %65 : vector<16x64xf32> to vector<16x1x64xf32>
    %82 = vector.broadcast %81 : vector<16x1x64xf32> to vector<16x16x64xf32>
    %83 = arith.mulf %80, %82 : vector<16x16x64xf32>
    %cst_42 = arith.constant dense<0.000000e+00> : vector<16x64xf32>
    %84 = vector.multi_reduction <add>, %83, %cst_42 [0] : vector<16x16x64xf32> to vector<16x64xf32>
    %c16 = arith.constant 16 : index
    %c0_43 = arith.constant 0 : index
    %85 = vector.load %arg3[%c16, %c0_43] : memref<32x16xf32, #tpu.memory_space<vmem>>, vector<16x16xf32>
    %c16_44 = arith.constant 16 : index
    %c0_45 = arith.constant 0 : index
    %86 = vector.load %arg4[%c16_44, %c0_45] : memref<32x1xf32, #tpu.memory_space<vmem>>, vector<16x1xf32>
    %cst_46 = arith.constant dense<0.000000e+00> : vector<16x64xf32>
    %87 = tpu.matmul %85, %84, %cst_46 {dimension_numbers = #tpu.dot_dimension_numbers<[1], [0], [0], [1], [0, 0, 1, 1], [], []>} : vector<16x16xf32>, vector<16x64xf32>, vector<16x64xf32> -> vector<16x64xf32>
    %88 = vector.broadcast %86 : vector<16x1xf32> to vector<16x64xf32>
    %89 = arith.addf %87, %88 : vector<16x64xf32>
    %c0_47 = arith.constant 0 : index
    %c0_48 = arith.constant 0 : index
    %90 = vector.load %arg5[%c0_47, %c0_48] : memref<80x16xf32, #tpu.memory_space<vmem>>, vector<80x16xf32>
    %cst_49 = arith.constant dense<0.000000e+00> : vector<80x64xf32>
    %91 = tpu.matmul %90, %89, %cst_49 {dimension_numbers = #tpu.dot_dimension_numbers<[1], [0], [0], [1], [0, 0, 1, 1], [], []>} : vector<80x16xf32>, vector<16x64xf32>, vector<80x64xf32> -> vector<80x64xf32>
    %c0_50 = arith.constant 0 : index
    %c0_51 = arith.constant 0 : index
    %92 = vector.load %arg6[%c0_50, %c0_51] : memref<80x1xf32, #tpu.memory_space<vmem>>, vector<80x1xf32>
    %93 = vector.broadcast %92 : vector<80x1xf32> to vector<80x64xf32>
    %94 = arith.addf %91, %93 : vector<80x64xf32>
    %cst_52 = arith.constant 0.000000e+00 : f32
    %95 = vector.broadcast %cst_52 : f32 to vector<80x64xf32>
    %96 = arith.maximumf %94, %95 : vector<80x64xf32>
    %c0_53 = arith.constant 0 : index
    %c0_54 = arith.constant 0 : index
    %97 = vector.load %arg7[%c0_53, %c0_54] : memref<8x80xf32, #tpu.memory_space<vmem>>, vector<8x80xf32>
    %cst_55 = arith.constant dense<0.000000e+00> : vector<8x64xf32>
    %98 = tpu.matmul %97, %96, %cst_55 {dimension_numbers = #tpu.dot_dimension_numbers<[1], [0], [0], [1], [0, 0, 1, 1], [], []>} : vector<8x80xf32>, vector<80x64xf32>, vector<8x64xf32> -> vector<8x64xf32>
    %c0_56 = arith.constant 0 : index
    %c0_57 = arith.constant 0 : index
    %99 = vector.load %arg8[%c0_56, %c0_57] : memref<8x1xf32, #tpu.memory_space<vmem>>, vector<8x1xf32>
    %100 = vector.broadcast %99 : vector<8x1xf32> to vector<8x64xf32>
    %101 = arith.addf %98, %100 : vector<8x64xf32>
    %c0_58 = arith.constant 0 : index
    %c0_59 = arith.constant 0 : index
    %102 = vector.load %arg9[%c0_58, %c0_59] : memref<40x8xf32, #tpu.memory_space<vmem>>, vector<40x8xf32>
    %cst_60 = arith.constant dense<0.000000e+00> : vector<40x64xf32>
    %103 = tpu.matmul %102, %101, %cst_60 {dimension_numbers = #tpu.dot_dimension_numbers<[1], [0], [0], [1], [0, 0, 1, 1], [], []>} : vector<40x8xf32>, vector<8x64xf32>, vector<40x64xf32> -> vector<40x64xf32>
    %c0_61 = arith.constant 0 : index
    %c0_62 = arith.constant 0 : index
    %104 = vector.load %arg10[%c0_61, %c0_62] : memref<40x1xf32, #tpu.memory_space<vmem>>, vector<40x1xf32>
    %105 = vector.broadcast %104 : vector<40x1xf32> to vector<40x64xf32>
    %106 = arith.addf %103, %105 : vector<40x64xf32>
    %cst_63 = arith.constant 0.000000e+00 : f32
    %107 = vector.broadcast %cst_63 : f32 to vector<40x64xf32>
    %108 = arith.maximumf %106, %107 : vector<40x64xf32>
    %c0_64 = arith.constant 0 : index
    %c0_65 = arith.constant 0 : index
    %109 = vector.load %arg11[%c0_64, %c0_65] : memref<8x40xf32, #tpu.memory_space<vmem>>, vector<8x40xf32>
    %cst_66 = arith.constant dense<0.000000e+00> : vector<8x64xf32>
    %110 = tpu.matmul %109, %108, %cst_66 {dimension_numbers = #tpu.dot_dimension_numbers<[1], [0], [0], [1], [0, 0, 1, 1], [], []>} : vector<8x40xf32>, vector<40x64xf32>, vector<8x64xf32> -> vector<8x64xf32>
    %c0_67 = arith.constant 0 : index
    %c0_68 = arith.constant 0 : index
    %111 = vector.load %arg12[%c0_67, %c0_68] : memref<8x1xf32, #tpu.memory_space<vmem>>, vector<8x1xf32>
    %112 = vector.broadcast %111 : vector<8x1xf32> to vector<8x64xf32>
    %113 = arith.addf %110, %112 : vector<8x64xf32>
    %c1 = arith.constant 1 : index
    %c0_69 = arith.constant 0 : index
    %c0_70 = arith.constant 0 : index
    %114 = vector.load %arg13[%c1, %c0_69, %c0_70] : memref<2x16x64xf32, #tpu.memory_space<vmem>>, vector<1x8x64xf32>
    %115 = vector.shape_cast %114 : vector<1x8x64xf32> to vector<8x64xf32>
    %116 = vector.shape_cast %113 : vector<8x64xf32> to vector<1x8x64xf32>
    tpu.vector_store %arg13[%c1, %c0_69, %c0_70], %116 {strides = array<i32>} : memref<2x16x64xf32, #tpu.memory_space<vmem>>, vector<1x8x64xf32>,
    %c1_71 = arith.constant 1 : index
    %c8_72 = arith.constant 8 : index
    %c0_73 = arith.constant 0 : index
    %117 = vector.load %arg13[%c1_71, %c8_72, %c0_73] : memref<2x16x64xf32, #tpu.memory_space<vmem>>, vector<1x8x64xf32>
    %118 = vector.shape_cast %117 : vector<1x8x64xf32> to vector<8x64xf32>
    %119 = vector.shape_cast %101 : vector<8x64xf32> to vector<1x8x64xf32>
    tpu.vector_store %arg13[%c1_71, %c8_72, %c0_73], %119 {strides = array<i32>} : memref<2x16x64xf32, #tpu.memory_space<vmem>>, vector<1x8x64xf32>,
    return
  }
}

</mosaic_0001>

<llo_original>
// kernel: tpu_custom_call.1
$region0: #{tpu_custom_call.1}
  #allocation0 [shape = 'u32[]', space=smem, size = 0x4, offset = 0x4, fixed_abs, tag = 'smem constant byte address 0x4 - core index']
  #allocation1 [shape = 'u32[144,128]{1,0:T(1,128)}', space=vmem, size = 0x12000, scoped, tag = 'internal scratch']
  %s0 = inlined_call_operand.vmem [shape: f32[16,64], index: 0, kind: input, shape index: {}]
  %s1 = inlined_call_operand.vmem [shape: f32[96,16], index: 1, kind: input, shape index: {}]
  %s2 = inlined_call_operand.vmem [shape: f32[96,1], index: 2, kind: input, shape index: {}]
  %s3 = inlined_call_operand.vmem [shape: f32[32,16], index: 3, kind: input, shape index: {}]
  %s4 = inlined_call_operand.vmem [shape: f32[32,1], index: 4, kind: input, shape index: {}]
  %s5 = inlined_call_operand.vmem [shape: f32[80,16], index: 5, kind: input, shape index: {}]
  %s6 = inlined_call_operand.vmem [shape: f32[80,1], index: 6, kind: input, shape index: {}]
  %s7 = inlined_call_operand.vmem [shape: f32[8,80], index: 7, kind: input, shape index: {}]
  %s8 = inlined_call_operand.vmem [shape: f32[8,1], index: 8, kind: input, shape index: {}]
  %s9 = inlined_call_operand.vmem [shape: f32[40,8], index: 9, kind: input, shape index: {}]
  %s10 = inlined_call_operand.vmem [shape: f32[40,1], index: 10, kind: input, shape index: {}]
  %s11 = inlined_call_operand.vmem [shape: f32[8,40], index: 11, kind: input, shape index: {}]
  %s12 = inlined_call_operand.vmem [shape: f32[8,1], index: 12, kind: input, shape index: {}]
  %s13 = inlined_call_operand.hbm [shape: f32[2,16,64], index: 13, kind: output, shape index: {}]
  %s14 = sld [smem:[#allocation0]]
  $region62: #{tpu_custom_call.1} parent=0
    _
  %s16 = ssub.s32 1, %s14
  %s17 = scalar_select 0, %s16, %s14
  $region1: #{tpu_custom_call.1} parent=0
    #allocation2 [shape = 'u8[16384]{0}', space=vmem, size = 0x4000, scoped, tag = 'output window, operand 0, single buffered']
    #allocation3 [shape = 's32[1]{0}', space=sflag, size = 0x4, scoped, tag = 'scoped memory for tpu_custom_call.1']
    %18 = vsyncpa [#allocation3], 0
    // Predicated region
    $region2: #{tpu_custom_call.1} parent=1 // pred_check
      _
    $region3: #{tpu_custom_call.1} parent=1 // pred_check_branch
      %20 = sbr.rel (0) target = $region5
    $region4: #{tpu_custom_call.1} parent=1 // pred_region
      _
    $region5: #{tpu_custom_call.1} parent=1 // pred_fallthru
      _
    // Predicated region
    $region6: #{tpu_custom_call.1} parent=1 // pred_check
      _
    $region7: #{tpu_custom_call.1} parent=1 // pred_check_branch
      %22 = sbr.rel (0) target = $region9
    $region8: #{tpu_custom_call.1} parent=1 // pred_region
      _
    $region9: #{tpu_custom_call.1} parent=1 // pred_fallthru
      _
    // Predicated region
    $region10: #{tpu_custom_call.1} parent=1 // pred_check
      _
    $region11: #{tpu_custom_call.1} parent=1 // pred_check_branch
      %24 = sbr.rel (0) target = $region13
    $region12: #{tpu_custom_call.1} parent=1 // pred_region
      _
    $region13: #{tpu_custom_call.1} parent=1 // pred_fallthru
      _
    // Predicated region
    $region14: #{tpu_custom_call.1} parent=1 // pred_check
      _
    $region15: #{tpu_custom_call.1} parent=1 // pred_check_branch
      %26 = sbr.rel (0) target = $region17
    $region16: #{tpu_custom_call.1} parent=1 // pred_region
      _
    $region17: #{tpu_custom_call.1} parent=1 // pred_fallthru
      _
    // Predicated region
    $region18: #{tpu_custom_call.1} parent=1 // pred_check
      _
    $region19: #{tpu_custom_call.1} parent=1 // pred_check_branch
      %28 = sbr.rel (0) target = $region21
    $region20: #{tpu_custom_call.1} parent=1 // pred_region
      _
    $region21: #{tpu_custom_call.1} parent=1 // pred_fallthru
      _
    // Predicated region
    $region22: #{tpu_custom_call.1} parent=1 // pred_check
      _
    $region23: #{tpu_custom_call.1} parent=1 // pred_check_branch
      %30 = sbr.rel (0) target = $region25
    $region24: #{tpu_custom_call.1} parent=1 // pred_region
      _
    $region25: #{tpu_custom_call.1} parent=1 // pred_fallthru
      _
    // Predicated region
    $region26: #{tpu_custom_call.1} parent=1 // pred_check
      _
    $region27: #{tpu_custom_call.1} parent=1 // pred_check_branch
      %32 = sbr.rel (0) target = $region29
    $region28: #{tpu_custom_call.1} parent=1 // pred_region
      _
    $region29: #{tpu_custom_call.1} parent=1 // pred_fallthru
      _
    // Predicated region
    $region30: #{tpu_custom_call.1} parent=1 // pred_check
      _
    $region31: #{tpu_custom_call.1} parent=1 // pred_check_branch
      %34 = sbr.rel (0) target = $region33
    $region32: #{tpu_custom_call.1} parent=1 // pred_region
      _
    $region33: #{tpu_custom_call.1} parent=1 // pred_fallthru
      _
    // Predicated region
    $region34: #{tpu_custom_call.1} parent=1 // pred_check
      _
    $region35: #{tpu_custom_call.1} parent=1 // pred_check_branch
      %36 = sbr.rel (0) target = $region37
    $region36: #{tpu_custom_call.1} parent=1 // pred_region
      _
    $region37: #{tpu_custom_call.1} parent=1 // pred_fallthru
      _
    // Predicated region
    $region38: #{tpu_custom_call.1} parent=1 // pred_check
      _
    $region39: #{tpu_custom_call.1} parent=1 // pred_check_branch
      %38 = sbr.rel (0) target = $region41
    $region40: #{tpu_custom_call.1} parent=1 // pred_region
      _
    $region41: #{tpu_custom_call.1} parent=1 // pred_fallthru
      _
    // Predicated region
    $region42: #{tpu_custom_call.1} parent=1 // pred_check
      _
    $region43: #{tpu_custom_call.1} parent=1 // pred_check_branch
      %40 = sbr.rel (0) target = $region45
    $region44: #{tpu_custom_call.1} parent=1 // pred_region
      _
    $region45: #{tpu_custom_call.1} parent=1 // pred_fallthru
      _
    // Predicated region
    $region46: #{tpu_custom_call.1} parent=1 // pred_check
      _
    $region47: #{tpu_custom_call.1} parent=1 // pred_check_branch
      %42 = sbr.rel (0) target = $region49
    $region48: #{tpu_custom_call.1} parent=1 // pred_region
      _
    $region49: #{tpu_custom_call.1} parent=1 // pred_fallthru
      _
    // Predicated region
    $region50: #{tpu_custom_call.1} parent=1 // pred_check
      _
    $region51: #{tpu_custom_call.1} parent=1 // pred_check_branch
      %44 = sbr.rel (0) target = $region53
    $region52: #{tpu_custom_call.1} parent=1 // pred_region
      _
    $region53: #{tpu_custom_call.1} parent=1 // pred_fallthru
      _
    %v45 = vld [vmem:[%s0] sm:$0xff]
    %v46 = vld [vmem:[%s0 + $0x8] sm:$0xff]
    %v47 = vld [vmem:[%s1] sm:$0xff]
    %v48 = vld [vmem:[%s1 + $0x8] sm:$0xff]
    %v49 = vld [vmem:[%s1 + $0x10] sm:$0xff]
    %v50 = vld [vmem:[%s1 + $0x18] sm:$0xff]
    %v51 = vld [vmem:[%s1 + $0x20] sm:$0xff]
    %v52 = vld [vmem:[%s1 + $0x28] sm:$0xff]
    %v53 = vld [vmem:[%s1 + $0x30] sm:$0xff]
    %v54 = vld [vmem:[%s1 + $0x38] sm:$0xff]
    %v55 = vld [vmem:[%s1 + $0x40] sm:$0xff]
    %v56 = vld [vmem:[%s1 + $0x48] sm:$0xff]
    %v57 = vld [vmem:[%s1 + $0x50] sm:$0xff]
    %v58 = vld [vmem:[%s1 + $0x58] sm:$0xff]
    %v59 = vld [vmem:[%s2] sm:$0xff]
    %v60 = vld [vmem:[%s2 + $0x8] sm:$0xff]
    %v61 = vld [vmem:[%s2 + $0x10] sm:$0xff]
    %v62 = vld [vmem:[%s2 + $0x18] sm:$0xff]
    %v63 = vld [vmem:[%s2 + $0x20] sm:$0xff]
    %v64 = vld [vmem:[%s2 + $0x28] sm:$0xff]
    %v65 = vld [vmem:[%s2 + $0x30] sm:$0xff]
    %v66 = vld [vmem:[%s2 + $0x38] sm:$0xff]
    %v67 = vld [vmem:[%s2 + $0x40] sm:$0xff]
    %v68 = vld [vmem:[%s2 + $0x48] sm:$0xff]
    %v69 = vld [vmem:[%s2 + $0x50] sm:$0xff]
    %v70 = vld [vmem:[%s2 + $0x58] sm:$0xff]
    %72 = vset.pattern.permute.xlu0 0
    %73 = vperm.xlu0 %72, %v59
    %v74 = vpop.permute.xlu0 %73
    %77 = vset.pattern.permute.xlu0 0
    %78 = vperm.xlu0 %77, %v60
    %v79 = vpop.permute.xlu0 %78
    %82 = vset.pattern.permute.xlu0 0
    %83 = vperm.xlu0 %82, %v61
    %v84 = vpop.permute.xlu0 %83
    %87 = vset.pattern.permute.xlu0 0
    %88 = vperm.xlu0 %87, %v62
    %v89 = vpop.permute.xlu0 %88
    %92 = vset.pattern.permute.xlu0 0
    %93 = vperm.xlu0 %92, %v63
    %v94 = vpop.permute.xlu0 %93
    %97 = vset.pattern.permute.xlu0 0
    %98 = vperm.xlu0 %97, %v64
    %v99 = vpop.permute.xlu0 %98
    %102 = vset.pattern.permute.xlu0 0
    %103 = vperm.xlu0 %102, %v65
    %v104 = vpop.permute.xlu0 %103
    %107 = vset.pattern.permute.xlu0 0
    %108 = vperm.xlu0 %107, %v66
    %v109 = vpop.permute.xlu0 %108
    %112 = vset.pattern.permute.xlu0 0
    %113 = vperm.xlu0 %112, %v67
    %v114 = vpop.permute.xlu0 %113
    %117 = vset.pattern.permute.xlu0 0
    %118 = vperm.xlu0 %117, %v68
    %v119 = vpop.permute.xlu0 %118
    %122 = vset.pattern.permute.xlu0 0
    %123 = vperm.xlu0 %122, %v69
    %v124 = vpop.permute.xlu0 %123
    %127 = vset.pattern.permute.xlu0 0
    %128 = vperm.xlu0 %127, %v70
    %v129 = vpop.permute.xlu0 %128
    %vm131 = vcmask 130048
    %v133 = vsel %vm131, %v47, 0
    %v136 = vsel %vm131, %v48, 0
    %v139 = vsel %vm131, %v49, 0
    %v142 = vsel %vm131, %v50, 0
    %v145 = vsel %vm131, %v51, 0
    %v148 = vsel %vm131, %v52, 0
    %v151 = vsel %vm131, %v53, 0
    %v154 = vsel %vm131, %v54, 0
    %v157 = vsel %vm131, %v55, 0
    %v160 = vsel %vm131, %v56, 0
    %v163 = vsel %vm131, %v57, 0
    %v166 = vsel %vm131, %v58, 0
    %168 = vmatprep.subr.mxu0 0.0
    %169 = vmatpush1.msra.mxu0 %v45
    %170 = vmatprep.subr.mxu0 0.0
    %171 = vmatpush1.msra.mxu0 %v46
    %172 = vmatprep.subr.mxu0 0.0
    %173 = vmatpush1.msra.mxu0 0.0
    %174 = vmatprep.subr.mxu0 0.0
    %175 = vmatpush1.msra.mxu0 0.0
    %176 = vmatprep.subr.mxu0 0.0
    %177 = vmatpush1.msra.mxu0 0.0
    %178 = vmatprep.subr.mxu0 0.0
    %179 = vmatpush1.msra.mxu0 0.0
    %180 = vmatprep.subr.mxu0 0.0
    %181 = vmatpush1.msra.mxu0 0.0
    %182 = vmatprep.subr.mxu0 0.0
    %183 = vmatpush1.msra.mxu0 0.0
    %184 = vmatprep.subr.mxu0 0.0
    %185 = vmatpush1.msra.mxu0 0.0
    %186 = vmatprep.subr.mxu0 0.0
    %187 = vmatpush1.msra.mxu0 0.0
    %188 = vmatprep.subr.mxu0 0.0
    %189 = vmatpush1.msra.mxu0 0.0
    %190 = vmatprep.subr.mxu0 0.0
    %191 = vmatpush1.msra.mxu0 0.0
    %192 = vmatprep.subr.mxu0 0.0
    %193 = vmatpush1.msra.mxu0 0.0
    %194 = vmatprep.subr.mxu0 0.0
    %195 = vmatpush1.msra.mxu0 0.0
    %196 = vmatprep.subr.mxu0 0.0
    %197 = vmatpush1.msra.mxu0 0.0
    %198 = vmatprep.subr.mxu0 0.0
    %199 = vmatpush1.msra.mxu0 0.0
    %200 = vmatprep.subr.mxu0 0.0
    %201 = vmatpush1.msra.mxu0 0.0
    %202 = vmatprep.subr.mxu0 0.0
    %203 = vmatpush1.msra.mxu0 0.0
    %204 = vmatprep.subr.mxu0 0.0
    %205 = vmatpush1.msra.mxu0 0.0
    %206 = vmatprep.subr.mxu0 0.0
    %207 = vmatpush1.msra.mxu0 0.0
    %208 = vmatprep.subr.mxu0 0.0
    %209 = vmatpush1.msra.mxu0 0.0
    %210 = vmatprep.subr.mxu0 0.0
    %211 = vmatpush1.msra.mxu0 0.0
    %212 = vmatprep.subr.mxu0 0.0
    %213 = vmatpush1.msra.mxu0 0.0
    %214 = vmatprep.subr.mxu0 0.0
    %215 = vmatpush1.msra.mxu0 0.0
    %216 = vmatprep.subr.mxu0 0.0
    %217 = vmatpush1.msra.mxu0 0.0
    %218 = vmatprep.subr.mxu0 0.0
    %219 = vmatpush1.msra.mxu0 0.0
    %220 = vmatprep.subr.mxu0 0.0
    %221 = vmatpush1.msra.mxu0 0.0
    %222 = vmatprep.subr.mxu0 0.0
    %223 = vmatpush1.msra.mxu0 0.0
    %224 = vmatprep.subr.mxu0 0.0
    %225 = vmatpush1.msra.mxu0 0.0
    %226 = vmatprep.subr.mxu0 0.0
    %227 = vmatpush1.msra.mxu0 0.0
    %228 = vmatprep.subr.mxu0 0.0
    %229 = vmatpush1.msra.mxu0 0.0
    %230 = vmatprep.subr.mxu0 0.0
    %231 = vmatpush1.msra.mxu0 0.0
    %232 = vmatprep.mubr.f32.mxu0 0.0
    %233 = vmatmul.mubr.f32.gmra.mrb[0].mxu0 %v133
    %v234 = vpop.f32.mrb[0].mxu0
    %v235 = vadd.f32 %v74, %v234
    %v236 = vpop.f32.mrb[0].mxu0
    %237 = vmatprep.mubr.f32.mxu0 0.0
    %238 = vmatmul.mubr.f32.gmra.mrb[0].mxu0 %v136
    %v239 = vpop.f32.mrb[0].mxu0
    %v240 = vadd.f32 %v79, %v239
    %v241 = vpop.f32.mrb[0].mxu0
    %242 = vmatprep.mubr.f32.mxu0 0.0
    %243 = vmatmul.mubr.f32.gmra.mrb[0].mxu0 %v139
    %v244 = vpop.f32.mrb[0].mxu0
    %v245 = vadd.f32 %v84, %v244
    %v246 = vpop.f32.mrb[0].mxu0
    %247 = vmatprep.mubr.f32.mxu0 0.0
    %248 = vmatmul.mubr.f32.gmra.mrb[0].mxu0 %v142
    %v249 = vpop.f32.mrb[0].mxu0
    %v250 = vadd.f32 %v89, %v249
    %v251 = vpop.f32.mrb[0].mxu0
    %252 = vmatprep.mubr.f32.mxu0 0.0
    %253 = vmatmul.mubr.f32.gmra.mrb[0].mxu0 %v145
    %v254 = vpop.f32.mrb[0].mxu0
    %v255 = vadd.f32 %v94, %v254
    %v256 = vpop.f32.mrb[0].mxu0
    %257 = vmatprep.mubr.f32.mxu0 0.0
    %258 = vmatmul.mubr.f32.gmra.mrb[0].mxu0 %v148
    %v259 = vpop.f32.mrb[0].mxu0
    %v260 = vadd.f32 %v99, %v259
    %v261 = vpop.f32.mrb[0].mxu0
    %262 = vmatprep.mubr.f32.mxu0 0.0
    %263 = vmatmul.mubr.f32.gmra.mrb[0].mxu0 %v151
    %v264 = vpop.f32.mrb[0].mxu0
    %v265 = vadd.f32 %v104, %v264
    %v266 = vpop.f32.mrb[0].mxu0
    %267 = vmatprep.mubr.f32.mxu0 0.0
    %268 = vmatmul.mubr.f32.gmra.mrb[0].mxu0 %v154
    %v269 = vpop.f32.mrb[0].mxu0
    %v270 = vadd.f32 %v109, %v269
    %v271 = vpop.f32.mrb[0].mxu0
    %272 = vmatprep.mubr.f32.mxu0 0.0
    %273 = vmatmul.mubr.f32.gmra.mrb[0].mxu0 %v157
    %v274 = vpop.f32.mrb[0].mxu0
    %v275 = vadd.f32 %v114, %v274
    %v276 = vpop.f32.mrb[0].mxu0
    %277 = vmatprep.mubr.f32.mxu0 0.0
    %278 = vmatmul.mubr.f32.gmra.mrb[0].mxu0 %v160
    %v279 = vpop.f32.mrb[0].mxu0
    %v280 = vadd.f32 %v119, %v279
    %v281 = vpop.f32.mrb[0].mxu0
    %282 = vmatprep.mubr.f32.mxu0 0.0
    %283 = vmatmul.mubr.f32.gmra.mrb[0].mxu0 %v163
    %v284 = vpop.f32.mrb[0].mxu0
    %v285 = vadd.f32 %v124, %v284
    %v286 = vpop.f32.mrb[0].mxu0
    %287 = vmatprep.mubr.f32.mxu0 0.0
    %288 = vmatmul.mubr.f32.gmra.mrb[0].mxu0 %v166
    %v289 = vpop.f32.mrb[0].mxu0
    %v290 = vadd.f32 %v129, %v289
    %v291 = vpop.f32.mrb[0].mxu0
    %292 = vdwg.mxu0
    %v295 = vcombine.high %v245, %v245
    %v297 = vunpack.c.l.s4 1966171168
    %v298 = vunpack.c.0.s8 %v297
    %v299 = vlaneseq
    %v300 = vshrl.u32 %v299, 7
    %v301 = vsub.s32 %v298, %v300
    %v302 = vrot.slane %v245, %v301
    %v304 = vunpack.c.l.s4 1966171168
    %v305 = vunpack.c.0.s8 %v304
    %v306 = vlaneseq
    %v307 = vshrl.u32 %v306, 7
    %v308 = vsub.s32 %v305, %v307
    %v309 = vrot.slane %v295, %v308
    %v310 = vcombine.high %v302, %v302
    %v311 = vcombine.high %v309, %v309
    %v313 = vunpack.c.l.s4 1966171168
    %v314 = vunpack.c.0.s8 %v313
    %v315 = vlaneseq
    %v316 = vshrl.u32 %v315, 7
    %v317 = vsub.s32 %v314, %v316
    %v318 = vrot.slane %v302, %v317
    %v320 = vunpack.c.l.s4 1966171168
    %v321 = vunpack.c.0.s8 %v320
    %v322 = vlaneseq
    %v323 = vshrl.u32 %v322, 7
    %v324 = vsub.s32 %v321, %v323
    %v325 = vrot.slane %v309, %v324
    %v327 = vunpack.c.l.s4 1966171168
    %v328 = vunpack.c.0.s8 %v327
    %v329 = vlaneseq
    %v330 = vshrl.u32 %v329, 7
    %v331 = vsub.s32 %v328, %v330
    %v332 = vrot.slane %v310, %v331
    %v334 = vunpack.c.l.s4 1966171168
    %v335 = vunpack.c.0.s8 %v334
    %v336 = vlaneseq
    %v337 = vshrl.u32 %v336, 7
    %v338 = vsub.s32 %v335, %v337
    %v339 = vrot.slane %v311, %v338
    %v340 = vcombine.high %v318, %v318
    %v341 = vcombine.high %v325, %v325
    %v342 = vcombine.high %v332, %v332
    %v343 = vcombine.high %v339, %v339
    %v344 = vcombine.high %v250, %v250
    %v346 = vunpack.c.l.s4 1966171168
    %v347 = vunpack.c.0.s8 %v346
    %v348 = vlaneseq
    %v349 = vshrl.u32 %v348, 7
    %v350 = vsub.s32 %v347, %v349
    %v351 = vrot.slane %v250, %v350
    %v353 = vunpack.c.l.s4 1966171168
    %v354 = vunpack.c.0.s8 %v353
    %v355 = vlaneseq
    %v356 = vshrl.u32 %v355, 7
    %v357 = vsub.s32 %v354, %v356
    %v358 = vrot.slane %v344, %v357
    %v359 = vcombine.high %v351, %v351
    %v360 = vcombine.high %v358, %v358
    %v362 = vunpack.c.l.s4 1966171168
    %v363 = vunpack.c.0.s8 %v362
    %v364 = vlaneseq
    %v365 = vshrl.u32 %v364, 7
    %v366 = vsub.s32 %v363, %v365
    %v367 = vrot.slane %v351, %v366
    %v369 = vunpack.c.l.s4 1966171168
    %v370 = vunpack.c.0.s8 %v369
    %v371 = vlaneseq
    %v372 = vshrl.u32 %v371, 7
    %v373 = vsub.s32 %v370, %v372
    %v374 = vrot.slane %v358, %v373
    %v376 = vunpack.c.l.s4 1966171168
    %v377 = vunpack.c.0.s8 %v376
    %v378 = vlaneseq
    %v379 = vshrl.u32 %v378, 7
    %v380 = vsub.s32 %v377, %v379
    %v381 = vrot.slane %v359, %v380
    %v383 = vunpack.c.l.s4 1966171168
    %v384 = vunpack.c.0.s8 %v383
    %v385 = vlaneseq
    %v386 = vshrl.u32 %v385, 7
    %v387 = vsub.s32 %v384, %v386
    %v388 = vrot.slane %v360, %v387
    %v389 = vcombine.high %v367, %v367
    %v390 = vcombine.high %v374, %v374
    %v391 = vcombine.high %v381, %v381
    %v392 = vcombine.high %v388, %v388
    %v393 = vlaneseq
    %v394 = vshrl.u32 %v393, 7
    %v395 = vsub.s32 0, %v394
    %v396 = vrot.slane %v318, %v395
    %v397 = vlaneseq
    %v398 = vshrl.u32 %v397, 7
    %v399 = vsub.s32 0, %v398
    %v400 = vrot.slane %v332, %v399
    %v401 = vlaneseq
    %v402 = vshrl.u32 %v401, 7
    %v403 = vsub.s32 0, %v402
    %v404 = vrot.slane %v340, %v403
    %v405 = vlaneseq
    %v406 = vshrl.u32 %v405, 7
    %v407 = vsub.s32 0, %v406
    %v408 = vrot.slane %v342, %v407
    %v409 = vlaneseq
    %v410 = vshrl.u32 %v409, 7
    %v411 = vsub.s32 0, %v410
    %v412 = vrot.slane %v325, %v411
    %v413 = vlaneseq
    %v414 = vshrl.u32 %v413, 7
    %v415 = vsub.s32 0, %v414
    %v416 = vrot.slane %v339, %v415
    %v417 = vlaneseq
    %v418 = vshrl.u32 %v417, 7
    %v419 = vsub.s32 0, %v418
    %v420 = vrot.slane %v341, %v419
    %v421 = vlaneseq
    %v422 = vshrl.u32 %v421, 7
    %v423 = vsub.s32 0, %v422
    %v424 = vrot.slane %v343, %v423
    %v425 = vlaneseq
    %v426 = vshrl.u32 %v425, 7
    %v427 = vsub.s32 0, %v426
    %v428 = vrot.slane %v367, %v427
    %v429 = vlaneseq
    %v430 = vshrl.u32 %v429, 7
    %v431 = vsub.s32 0, %v430
    %v432 = vrot.slane %v381, %v431
    %v433 = vlaneseq
    %v434 = vshrl.u32 %v433, 7
    %v435 = vsub.s32 0, %v434
    %v436 = vrot.slane %v389, %v435
    %v437 = vlaneseq
    %v438 = vshrl.u32 %v437, 7
    %v439 = vsub.s32 0, %v438
    %v440 = vrot.slane %v391, %v439
    %v441 = vlaneseq
    %v442 = vshrl.u32 %v441, 7
    %v443 = vsub.s32 0, %v442
    %v444 = vrot.slane %v374, %v443
    %v445 = vlaneseq
    %v446 = vshrl.u32 %v445, 7
    %v447 = vsub.s32 0, %v446
    %v448 = vrot.slane %v388, %v447
    %v449 = vlaneseq
    %v450 = vshrl.u32 %v449, 7
    %v451 = vsub.s32 0, %v450
    %v452 = vrot.slane %v390, %v451
    %v453 = vlaneseq
    %v454 = vshrl.u32 %v453, 7
    %v455 = vsub.s32 0, %v454
    %v456 = vrot.slane %v392, %v455
    %v473 = vmul.f32 %v396, %v235
    %v474 = vmul.f32 %v396, %v240
    %v475 = vmul.f32 %v400, %v235
    %v476 = vmul.f32 %v400, %v240
    %v477 = vmul.f32 %v404, %v235
    %v478 = vmul.f32 %v404, %v240
    %v479 = vmul.f32 %v408, %v235
    %v480 = vmul.f32 %v408, %v240
    %v481 = vmul.f32 %v412, %v235
    %v482 = vmul.f32 %v412, %v240
    %v483 = vmul.f32 %v416, %v235
    %v484 = vmul.f32 %v416, %v240
    %v485 = vmul.f32 %v420, %v235
    %v486 = vmul.f32 %v420, %v240
    %v487 = vmul.f32 %v424, %v235
    %v488 = vmul.f32 %v424, %v240
    %v489 = vmul.f32 %v428, %v235
    %v490 = vmul.f32 %v428, %v240
    %v491 = vmul.f32 %v432, %v235
    %v492 = vmul.f32 %v432, %v240
    %v493 = vmul.f32 %v436, %v235
    %v494 = vmul.f32 %v436, %v240
    %v495 = vmul.f32 %v440, %v235
    %v496 = vmul.f32 %v440, %v240
    %v497 = vmul.f32 %v444, %v235
    %v498 = vmul.f32 %v444, %v240
    %v499 = vmul.f32 %v448, %v235
    %v500 = vmul.f32 %v448, %v240
    %v501 = vmul.f32 %v452, %v235
    %v502 = vmul.f32 %v452, %v240
    %v503 = vmul.f32 %v456, %v235
    %v504 = vmul.f32 %v456, %v240
    %vm505 = vcmask 523264
    %v506 = vsel %vm505, %v473, -inf
    %v507 = vsel %vm505, %v475, -inf
    %v508 = vsel %vm505, %v477, -inf
    %v509 = vmax.f32 %v506, %v508
    %v510 = vsel %vm505, %v479, -inf
    %v511 = vmax.f32 %v507, %v510
    %v512 = vsel %vm505, %v481, -inf
    %v513 = vmax.f32 %v509, %v512
    %v514 = vsel %vm505, %v483, -inf
    %v515 = vmax.f32 %v511, %v514
    %v516 = vsel %vm505, %v485, -inf
    %v517 = vmax.f32 %v513, %v516
    %v518 = vsel %vm505, %v487, -inf
    %v519 = vmax.f32 %v515, %v518
    %v520 = vsel %vm505, %v489, -inf
    %v521 = vmax.f32 %v517, %v520
    %v522 = vsel %vm505, %v491, -inf
    %v523 = vmax.f32 %v519, %v522
    %v524 = vsel %vm505, %v493, -inf
    %v525 = vmax.f32 %v521, %v524
    %v526 = vsel %vm505, %v495, -inf
    %v527 = vmax.f32 %v523, %v526
    %v528 = vsel %vm505, %v497, -inf
    %v529 = vmax.f32 %v525, %v528
    %v530 = vsel %vm505, %v499, -inf
    %v531 = vmax.f32 %v527, %v530
    %v532 = vsel %vm505, %v501, -inf
    %v533 = vmax.f32 %v529, %v532
    %v534 = vsel %vm505, %v503, -inf
    %v535 = vmax.f32 %v531, %v534
    %v536 = vmax.f32 %v533, %v535
    %v537 = vsel %vm505, %v474, -inf
    %v538 = vsel %vm505, %v476, -inf
    %v539 = vsel %vm505, %v478, -inf
    %v540 = vmax.f32 %v537, %v539
    %v541 = vsel %vm505, %v480, -inf
    %v542 = vmax.f32 %v538, %v541
    %v543 = vsel %vm505, %v482, -inf
    %v544 = vmax.f32 %v540, %v543
    %v545 = vsel %vm505, %v484, -inf
    %v546 = vmax.f32 %v542, %v545
    %v547 = vsel %vm505, %v486, -inf
    %v548 = vmax.f32 %v544, %v547
    %v549 = vsel %vm505, %v488, -inf
    %v550 = vmax.f32 %v546, %v549
    %v551 = vsel %vm505, %v490, -inf
    %v552 = vmax.f32 %v548, %v551
    %v553 = vsel %vm505, %v492, -inf
    %v554 = vmax.f32 %v550, %v553
    %v555 = vsel %vm505, %v494, -inf
    %v556 = vmax.f32 %v552, %v555
    %v557 = vsel %vm505, %v496, -inf
    %v558 = vmax.f32 %v554, %v557
    %v559 = vsel %vm505, %v498, -inf
    %v560 = vmax.f32 %v556, %v559
    %v561 = vsel %vm505, %v500, -inf
    %v562 = vmax.f32 %v558, %v561
    %v563 = vsel %vm505, %v502, -inf
    %v564 = vmax.f32 %v560, %v563
    %v565 = vsel %vm505, %v504, -inf
    %v566 = vmax.f32 %v562, %v565
    %v567 = vmax.f32 %v564, %v566
    %v568 = vsub.f32 %v473, %v536
    %v569 = vsub.f32 %v474, %v567
    %v570 = vsub.f32 %v475, %v536
    %v571 = vsub.f32 %v476, %v567
    %v572 = vsub.f32 %v477, %v536
    %v573 = vsub.f32 %v478, %v567
    %v574 = vsub.f32 %v479, %v536
    %v575 = vsub.f32 %v480, %v567
    %v576 = vsub.f32 %v481, %v536
    %v577 = vsub.f32 %v482, %v567
    %v578 = vsub.f32 %v483, %v536
    %v579 = vsub.f32 %v484, %v567
    %v580 = vsub.f32 %v485, %v536
    %v581 = vsub.f32 %v486, %v567
    %v582 = vsub.f32 %v487, %v536
    %v583 = vsub.f32 %v488, %v567
    %v584 = vsub.f32 %v489, %v536
    %v585 = vsub.f32 %v490, %v567
    %v586 = vsub.f32 %v491, %v536
    %v587 = vsub.f32 %v492, %v567
    %v588 = vsub.f32 %v493, %v536
    %v589 = vsub.f32 %v494, %v567
    %v590 = vsub.f32 %v495, %v536
    %v591 = vsub.f32 %v496, %v567
    %v592 = vsub.f32 %v497, %v536
    %v593 = vsub.f32 %v498, %v567
    %v594 = vsub.f32 %v499, %v536
    %v595 = vsub.f32 %v500, %v567
    %v596 = vsub.f32 %v501, %v536
    %v597 = vsub.f32 %v502, %v567
    %v598 = vsub.f32 %v503, %v536
    %v599 = vsub.f32 %v504, %v567
    %v600 = vmul.f32 %v568, 1.442695
    %v601 = vpow.pop %v600
    %v602 = vmul.f32 %v569, 1.442695
    %v603 = vpow.pop %v602
    %v604 = vmul.f32 %v570, 1.442695
    %v605 = vpow.pop %v604
    %v606 = vmul.f32 %v571, 1.442695
    %v607 = vpow.pop %v606
    %v608 = vmul.f32 %v572, 1.442695
    %v609 = vpow.pop %v608
    %v610 = vmul.f32 %v573, 1.442695
    %v611 = vpow.pop %v610
    %v612 = vmul.f32 %v574, 1.442695
    %v613 = vpow.pop %v612
    %v614 = vmul.f32 %v575, 1.442695
    %v615 = vpow.pop %v614
    %v616 = vmul.f32 %v576, 1.442695
    %v617 = vpow.pop %v616
    %v618 = vmul.f32 %v577, 1.442695
    %v619 = vpow.pop %v618
    %v620 = vmul.f32 %v578, 1.442695
    %v621 = vpow.pop %v620
    %v622 = vmul.f32 %v579, 1.442695
    %v623 = vpow.pop %v622
    %v624 = vmul.f32 %v580, 1.442695
    %v625 = vpow.pop %v624
    %v626 = vmul.f32 %v581, 1.442695
    %v627 = vpow.pop %v626
    %v628 = vmul.f32 %v582, 1.442695
    %v629 = vpow.pop %v628
    %v630 = vmul.f32 %v583, 1.442695
    %v631 = vpow.pop %v630
    %v632 = vmul.f32 %v584, 1.442695
    %v633 = vpow.pop %v632
    %v634 = vmul.f32 %v585, 1.442695
    %v635 = vpow.pop %v634
    %v636 = vmul.f32 %v586, 1.442695
    %v637 = vpow.pop %v636
    %v638 = vmul.f32 %v587, 1.442695
    %v639 = vpow.pop %v638
    %v640 = vmul.f32 %v588, 1.442695
    %v641 = vpow.pop %v640
    %v642 = vmul.f32 %v589, 1.442695
    %v643 = vpow.pop %v642
    %v644 = vmul.f32 %v590, 1.442695
    %v645 = vpow.pop %v644
    %v646 = vmul.f32 %v591, 1.442695
    %v647 = vpow.pop %v646
    %v648 = vmul.f32 %v592, 1.442695
    %v649 = vpow.pop %v648
    %v650 = vmul.f32 %v593, 1.442695
    %v651 = vpow.pop %v650
    %v652 = vmul.f32 %v594, 1.442695
    %v653 = vpow.pop %v652
    %v654 = vmul.f32 %v595, 1.442695
    %v655 = vpow.pop %v654
    %v656 = vmul.f32 %v596, 1.442695
    %v657 = vpow.pop %v656
    %v658 = vmul.f32 %v597, 1.442695
    %v659 = vpow.pop %v658
    %v660 = vmul.f32 %v598, 1.442695
    %v661 = vpow.pop %v660
    %v662 = vmul.f32 %v599, 1.442695
    %v663 = vpow.pop %v662
    %v664 = vsel %vm505, %v601, 0.0
    %v665 = vsel %vm505, %v605, 0.0
    %v666 = vadd.f32 %v664, %v665
    %v667 = vsel %vm505, %v609, 0.0
    %v668 = vadd.f32 %v666, %v667
    %v669 = vsel %vm505, %v613, 0.0
    %v670 = vadd.f32 %v668, %v669
    %v671 = vsel %vm505, %v617, 0.0
    %v672 = vadd.f32 %v670, %v671
    %v673 = vsel %vm505, %v621, 0.0
    %v674 = vadd.f32 %v672, %v673
    %v675 = vsel %vm505, %v625, 0.0
    %v676 = vadd.f32 %v674, %v675
    %v677 = vsel %vm505, %v629, 0.0
    %v678 = vadd.f32 %v676, %v677
    %v679 = vsel %vm505, %v633, 0.0
    %v680 = vadd.f32 %v678, %v679
    %v681 = vsel %vm505, %v637, 0.0
    %v682 = vadd.f32 %v680, %v681
    %v683 = vsel %vm505, %v641, 0.0
    %v684 = vadd.f32 %v682, %v683
    %v685 = vsel %vm505, %v645, 0.0
    %v686 = vadd.f32 %v684, %v685
    %v687 = vsel %vm505, %v649, 0.0
    %v688 = vadd.f32 %v686, %v687
    %v689 = vsel %vm505, %v653, 0.0
    %v690 = vadd.f32 %v688, %v689
    %v691 = vsel %vm505, %v657, 0.0
    %v692 = vadd.f32 %v690, %v691
    %v693 = vsel %vm505, %v661, 0.0
    %v694 = vadd.f32 %v692, %v693
    %v695 = vsel %vm505, %v603, 0.0
    %v696 = vsel %vm505, %v607, 0.0
    %v697 = vadd.f32 %v695, %v696
    %v698 = vsel %vm505, %v611, 0.0
    %v699 = vadd.f32 %v697, %v698
    %v700 = vsel %vm505, %v615, 0.0
    %v701 = vadd.f32 %v699, %v700
    %v702 = vsel %vm505, %v619, 0.0
    %v703 = vadd.f32 %v701, %v702
    %v704 = vsel %vm505, %v623, 0.0
    %v705 = vadd.f32 %v703, %v704
    %v706 = vsel %vm505, %v627, 0.0
    %v707 = vadd.f32 %v705, %v706
    %v708 = vsel %vm505, %v631, 0.0
    %v709 = vadd.f32 %v707, %v708
    %v710 = vsel %vm505, %v635, 0.0
    %v711 = vadd.f32 %v709, %v710
    %v712 = vsel %vm505, %v639, 0.0
    %v713 = vadd.f32 %v711, %v712
    %v714 = vsel %vm505, %v643, 0.0
    %v715 = vadd.f32 %v713, %v714
    %v716 = vsel %vm505, %v647, 0.0
    %v717 = vadd.f32 %v715, %v716
    %v718 = vsel %vm505, %v651, 0.0
    %v719 = vadd.f32 %v717, %v718
    %v720 = vsel %vm505, %v655, 0.0
    %v721 = vadd.f32 %v719, %v720
    %v722 = vsel %vm505, %v659, 0.0
    %v723 = vadd.f32 %v721, %v722
    %v724 = vsel %vm505, %v663, 0.0
    %v725 = vadd.f32 %v723, %v724
    %v726 = vrcp.pop %v694
    %v727 = vrcp.pop %v725
    %v728 = vmul.f32 %v601, %v726
    %v729 = vmul.f32 %v603, %v727
    %v730 = vmul.f32 %v605, %v726
    %v731 = vmul.f32 %v607, %v727
    %v732 = vmul.f32 %v609, %v726
    %v733 = vmul.f32 %v611, %v727
    %v734 = vmul.f32 %v613, %v726
    %v735 = vmul.f32 %v615, %v727
    %v736 = vmul.f32 %v617, %v726
    %v737 = vmul.f32 %v619, %v727
    %v738 = vmul.f32 %v621, %v726
    %v739 = vmul.f32 %v623, %v727
    %v740 = vmul.f32 %v625, %v726
    %v741 = vmul.f32 %v627, %v727
    %v742 = vmul.f32 %v629, %v726
    %v743 = vmul.f32 %v631, %v727
    %v744 = vmul.f32 %v633, %v726
    %v745 = vmul.f32 %v635, %v727
    %v746 = vmul.f32 %v637, %v726
    %v747 = vmul.f32 %v639, %v727
    %v748 = vmul.f32 %v641, %v726
    %v749 = vmul.f32 %v643, %v727
    %v750 = vmul.f32 %v645, %v726
    %v751 = vmul.f32 %v647, %v727
    %v752 = vmul.f32 %v649, %v726
    %v753 = vmul.f32 %v651, %v727
    %v754 = vmul.f32 %v653, %v726
    %v755 = vmul.f32 %v655, %v727
    %v756 = vmul.f32 %v657, %v726
    %v757 = vmul.f32 %v659, %v727
    %v758 = vmul.f32 %v661, %v726
    %v759 = vmul.f32 %v663, %v727
    %v762 = vcombine.high %v255, %v255
    %v764 = vunpack.c.l.s4 1966171168
    %v765 = vunpack.c.0.s8 %v764
    %v766 = vlaneseq
    %v767 = vshrl.u32 %v766, 7
    %v768 = vsub.s32 %v765, %v767
    %v769 = vrot.slane %v255, %v768
    %v771 = vunpack.c.l.s4 1966171168
    %v772 = vunpack.c.0.s8 %v771
    %v773 = vlaneseq
    %v774 = vshrl.u32 %v773, 7
    %v775 = vsub.s32 %v772, %v774
    %v776 = vrot.slane %v762, %v775
    %v777 = vcombine.high %v769, %v769
    %v778 = vcombine.high %v776, %v776
    %v780 = vunpack.c.l.s4 1966171168
    %v781 = vunpack.c.0.s8 %v780
    %v782 = vlaneseq
    %v783 = vshrl.u32 %v782, 7
    %v784 = vsub.s32 %v781, %v783
    %v785 = vrot.slane %v769, %v784
    %v787 = vunpack.c.l.s4 1966171168
    %v788 = vunpack.c.0.s8 %v787
    %v789 = vlaneseq
    %v790 = vshrl.u32 %v789, 7
    %v791 = vsub.s32 %v788, %v790
    %v792 = vrot.slane %v776, %v791
    %v794 = vunpack.c.l.s4 1966171168
    %v795 = vunpack.c.0.s8 %v794
    %v796 = vlaneseq
    %v797 = vshrl.u32 %v796, 7
    %v798 = vsub.s32 %v795, %v797
    %v799 = vrot.slane %v777, %v798
    %v801 = vunpack.c.l.s4 1966171168
    %v802 = vunpack.c.0.s8 %v801
    %v803 = vlaneseq
    %v804 = vshrl.u32 %v803, 7
    %v805 = vsub.s32 %v802, %v804
    %v806 = vrot.slane %v778, %v805
    %v807 = vcombine.high %v785, %v785
    %v808 = vcombine.high %v792, %v792
    %v809 = vcombine.high %v799, %v799
    %v810 = vcombine.high %v806, %v806
    %v811 = vcombine.high %v260, %v260
    %v813 = vunpack.c.l.s4 1966171168
    %v814 = vunpack.c.0.s8 %v813
    %v815 = vlaneseq
    %v816 = vshrl.u32 %v815, 7
    %v817 = vsub.s32 %v814, %v816
    %v818 = vrot.slane %v260, %v817
    %v820 = vunpack.c.l.s4 1966171168
    %v821 = vunpack.c.0.s8 %v820
    %v822 = vlaneseq
    %v823 = vshrl.u32 %v822, 7
    %v824 = vsub.s32 %v821, %v823
    %v825 = vrot.slane %v811, %v824
    %v826 = vcombine.high %v818, %v818
    %v827 = vcombine.high %v825, %v825
    %v829 = vunpack.c.l.s4 1966171168
    %v830 = vunpack.c.0.s8 %v829
    %v831 = vlaneseq
    %v832 = vshrl.u32 %v831, 7
    %v833 = vsub.s32 %v830, %v832
    %v834 = vrot.slane %v818, %v833
    %v836 = vunpack.c.l.s4 1966171168
    %v837 = vunpack.c.0.s8 %v836
    %v838 = vlaneseq
    %v839 = vshrl.u32 %v838, 7
    %v840 = vsub.s32 %v837, %v839
    %v841 = vrot.slane %v825, %v840
    %v843 = vunpack.c.l.s4 1966171168
    %v844 = vunpack.c.0.s8 %v843
    %v845 = vlaneseq
    %v846 = vshrl.u32 %v845, 7
    %v847 = vsub.s32 %v844, %v846
    %v848 = vrot.slane %v826, %v847
    %v850 = vunpack.c.l.s4 1966171168
    %v851 = vunpack.c.0.s8 %v850
    %v852 = vlaneseq
    %v853 = vshrl.u32 %v852, 7
    %v854 = vsub.s32 %v851, %v853
    %v855 = vrot.slane %v827, %v854
    %v856 = vcombine.high %v834, %v834
    %v857 = vcombine.high %v841, %v841
    %v858 = vcombine.high %v848, %v848
    %v859 = vcombine.high %v855, %v855
    %v860 = vlaneseq
    %v861 = vshrl.u32 %v860, 7
    %v862 = vsub.s32 0, %v861
    %v863 = vrot.slane %v785, %v862
    %v864 = vlaneseq
    %v865 = vshrl.u32 %v864, 7
    %v866 = vsub.s32 0, %v865
    %v867 = vrot.slane %v799, %v866
    %v868 = vlaneseq
    %v869 = vshrl.u32 %v868, 7
    %v870 = vsub.s32 0, %v869
    %v871 = vrot.slane %v807, %v870
    %v872 = vlaneseq
    %v873 = vshrl.u32 %v872, 7
    %v874 = vsub.s32 0, %v873
    %v875 = vrot.slane %v809, %v874
    %v876 = vlaneseq
    %v877 = vshrl.u32 %v876, 7
    %v878 = vsub.s32 0, %v877
    %v879 = vrot.slane %v792, %v878
    %v880 = vlaneseq
    %v881 = vshrl.u32 %v880, 7
    %v882 = vsub.s32 0, %v881
    %v883 = vrot.slane %v806, %v882
    %v884 = vlaneseq
    %v885 = vshrl.u32 %v884, 7
    %v886 = vsub.s32 0, %v885
    %v887 = vrot.slane %v808, %v886
    %v888 = vlaneseq
    %v889 = vshrl.u32 %v888, 7
    %v890 = vsub.s32 0, %v889
    %v891 = vrot.slane %v810, %v890
    %v892 = vlaneseq
    %v893 = vshrl.u32 %v892, 7
    %v894 = vsub.s32 0, %v893
    %v895 = vrot.slane %v834, %v894
    %v896 = vlaneseq
    %v897 = vshrl.u32 %v896, 7
    %v898 = vsub.s32 0, %v897
    %v899 = vrot.slane %v848, %v898
    %v900 = vlaneseq
    %v901 = vshrl.u32 %v900, 7
    %v902 = vsub.s32 0, %v901
    %v903 = vrot.slane %v856, %v902
    %v904 = vlaneseq
    %v905 = vshrl.u32 %v904, 7
    %v906 = vsub.s32 0, %v905
    %v907 = vrot.slane %v858, %v906
    %v908 = vlaneseq
    %v909 = vshrl.u32 %v908, 7
    %v910 = vsub.s32 0, %v909
    %v911 = vrot.slane %v841, %v910
    %v912 = vlaneseq
    %v913 = vshrl.u32 %v912, 7
    %v914 = vsub.s32 0, %v913
    %v915 = vrot.slane %v855, %v914
    %v916 = vlaneseq
    %v917 = vshrl.u32 %v916, 7
    %v918 = vsub.s32 0, %v917
    %v919 = vrot.slane %v857, %v918
    %v920 = vlaneseq
    %v921 = vshrl.u32 %v920, 7
    %v922 = vsub.s32 0, %v921
    %v923 = vrot.slane %v859, %v922
    %v940 = vmul.f32 %v728, %v863
    %v941 = vmul.f32 %v729, %v863
    %v942 = vmul.f32 %v730, %v867
    %v943 = vmul.f32 %v731, %v867
    %v944 = vmul.f32 %v732, %v871
    %v945 = vmul.f32 %v733, %v871
    %v946 = vmul.f32 %v734, %v875
    %v947 = vmul.f32 %v735, %v875
    %v948 = vmul.f32 %v736, %v879
    %v949 = vmul.f32 %v737, %v879
    %v950 = vmul.f32 %v738, %v883
    %v951 = vmul.f32 %v739, %v883
    %v952 = vmul.f32 %v740, %v887
    %v953 = vmul.f32 %v741, %v887
    %v954 = vmul.f32 %v742, %v891
    %v955 = vmul.f32 %v743, %v891
    %v956 = vmul.f32 %v744, %v895
    %v957 = vmul.f32 %v745, %v895
    %v958 = vmul.f32 %v746, %v899
    %v959 = vmul.f32 %v747, %v899
    %v960 = vmul.f32 %v748, %v903
    %v961 = vmul.f32 %v749, %v903
    %v962 = vmul.f32 %v750, %v907
    %v963 = vmul.f32 %v751, %v907
    %v964 = vmul.f32 %v752, %v911
    %v965 = vmul.f32 %v753, %v911
    %v966 = vmul.f32 %v754, %v915
    %v967 = vmul.f32 %v755, %v915
    %v968 = vmul.f32 %v756, %v919
    %v969 = vmul.f32 %v757, %v919
    %v970 = vmul.f32 %v758, %v923
    %v971 = vmul.f32 %v759, %v923
    %v972 = vsel %vm505, %v940, 0.0
    %v973 = vsel %vm505, %v942, 0.0
    %v974 = vadd.f32 %v972, %v973
    %v975 = vsel %vm505, %v944, 0.0
    %v976 = vadd.f32 %v974, %v975
    %v977 = vsel %vm505, %v946, 0.0
    %v978 = vadd.f32 %v976, %v977
    %v979 = vsel %vm505, %v948, 0.0
    %v980 = vadd.f32 %v978, %v979
    %v981 = vsel %vm505, %v950, 0.0
    %v982 = vadd.f32 %v980, %v981
    %v983 = vsel %vm505, %v952, 0.0
    %v984 = vadd.f32 %v982, %v983
    %v985 = vsel %vm505, %v954, 0.0
    %v986 = vadd.f32 %v984, %v985
    %v987 = vsel %vm505, %v956, 0.0
    %v988 = vadd.f32 %v986, %v987
    %v989 = vsel %vm505, %v958, 0.0
    %v990 = vadd.f32 %v988, %v989
    %v991 = vsel %vm505, %v960, 0.0
    %v992 = vadd.f32 %v990, %v991
    %v993 = vsel %vm505, %v962, 0.0
    %v994 = vadd.f32 %v992, %v993
    %v995 = vsel %vm505, %v964, 0.0
    %v996 = vadd.f32 %v994, %v995
    %v997 = vsel %vm505, %v966, 0.0
    %v998 = vadd.f32 %v996, %v997
    %v999 = vsel %vm505, %v968, 0.0
    %v1000 = vadd.f32 %v998, %v999
    %v1001 = vsel %vm505, %v970, 0.0
    %v1002 = vadd.f32 %v1000, %v1001
    %v1003 = vsel %vm505, %v941, 0.0
    %v1004 = vsel %vm505, %v943, 0.0
    %v1005 = vadd.f32 %v1003, %v1004
    %v1006 = vsel %vm505, %v945, 0.0
    %v1007 = vadd.f32 %v1005, %v1006
    %v1008 = vsel %vm505, %v947, 0.0
    %v1009 = vadd.f32 %v1007, %v1008
    %v1010 = vsel %vm505, %v949, 0.0
    %v1011 = vadd.f32 %v1009, %v1010
    %v1012 = vsel %vm505, %v951, 0.0
    %v1013 = vadd.f32 %v1011, %v1012
    %v1014 = vsel %vm505, %v953, 0.0
    %v1015 = vadd.f32 %v1013, %v1014
    %v1016 = vsel %vm505, %v955, 0.0
    %v1017 = vadd.f32 %v1015, %v1016
    %v1018 = vsel %vm505, %v957, 0.0
    %v1019 = vadd.f32 %v1017, %v1018
    %v1020 = vsel %vm505, %v959, 0.0
    %v1021 = vadd.f32 %v1019, %v1020
    %v1022 = vsel %vm505, %v961, 0.0
    %v1023 = vadd.f32 %v1021, %v1022
    %v1024 = vsel %vm505, %v963, 0.0
    %v1025 = vadd.f32 %v1023, %v1024
    %v1026 = vsel %vm505, %v965, 0.0
    %v1027 = vadd.f32 %v1025, %v1026
    %v1028 = vsel %vm505, %v967, 0.0
    %v1029 = vadd.f32 %v1027, %v1028
    %v1030 = vsel %vm505, %v969, 0.0
    %v1031 = vadd.f32 %v1029, %v1030
    %v1032 = vsel %vm505, %v971, 0.0
    %v1033 = vadd.f32 %v1031, %v1032
    %v1034 = vld [vmem:[%s3] sm:$0xff]
    %v1035 = vld [vmem:[%s3 + $0x8] sm:$0xff]
    %v1036 = vld [vmem:[%s4] sm:$0xff]
    %v1037 = vld [vmem:[%s4 + $0x8] sm:$0xff]
    %1039 = vset.pattern.permute.xlu0 0
    %1040 = vperm.xlu0 %1039, %v1036
    %v1041 = vpop.permute.xlu0 %1040
    %1044 = vset.pattern.permute.xlu0 0
    %1045 = vperm.xlu0 %1044, %v1037
    %v1046 = vpop.permute.xlu0 %1045
    %v1049 = vsel %vm131, %v1034, 0
    %v1052 = vsel %vm131, %v1035, 0
    %1054 = vmatprep.subr.mxu0 0.0
    %1055 = vmatpush1.msra.mxu0 %v1002
    %1056 = vmatprep.subr.mxu0 0.0
    %1057 = vmatpush1.msra.mxu0 %v1033
    %1058 = vmatprep.subr.mxu0 0.0
    %1059 = vmatpush1.msra.mxu0 0.0
    %1060 = vmatprep.subr.mxu0 0.0
    %1061 = vmatpush1.msra.mxu0 0.0
    %1062 = vmatprep.subr.mxu0 0.0
    %1063 = vmatpush1.msra.mxu0 0.0
    %1064 = vmatprep.subr.mxu0 0.0
    %1065 = vmatpush1.msra.mxu0 0.0
    %1066 = vmatprep.subr.mxu0 0.0
    %1067 = vmatpush1.msra.mxu0 0.0
    %1068 = vmatprep.subr.mxu0 0.0
    %1069 = vmatpush1.msra.mxu0 0.0
    %1070 = vmatprep.subr.mxu0 0.0
    %1071 = vmatpush1.msra.mxu0 0.0
    %1072 = vmatprep.subr.mxu0 0.0
    %1073 = vmatpush1.msra.mxu0 0.0
    %1074 = vmatprep.subr.mxu0 0.0
    %1075 = vmatpush1.msra.mxu0 0.0
    %1076 = vmatprep.subr.mxu0 0.0
    %1077 = vmatpush1.msra.mxu0 0.0
    %1078 = vmatprep.subr.mxu0 0.0
    %1079 = vmatpush1.msra.mxu0 0.0
    %1080 = vmatprep.subr.mxu0 0.0
    %1081 = vmatpush1.msra.mxu0 0.0
    %1082 = vmatprep.subr.mxu0 0.0
    %1083 = vmatpush1.msra.mxu0 0.0
    %1084 = vmatprep.subr.mxu0 0.0
    %1085 = vmatpush1.msra.mxu0 0.0
    %1086 = vmatprep.subr.mxu0 0.0
    %1087 = vmatpush1.msra.mxu0 0.0
    %1088 = vmatprep.subr.mxu0 0.0
    %1089 = vmatpush1.msra.mxu0 0.0
    %1090 = vmatprep.subr.mxu0 0.0
    %1091 = vmatpush1.msra.mxu0 0.0
    %1092 = vmatprep.subr.mxu0 0.0
    %1093 = vmatpush1.msra.mxu0 0.0
    %1094 = vmatprep.subr.mxu0 0.0
    %1095 = vmatpush1.msra.mxu0 0.0
    %1096 = vmatprep.subr.mxu0 0.0
    %1097 = vmatpush1.msra.mxu0 0.0
    %1098 = vmatprep.subr.mxu0 0.0
    %1099 = vmatpush1.msra.mxu0 0.0
    %1100 = vmatprep.subr.mxu0 0.0
    %1101 = vmatpush1.msra.mxu0 0.0
    %1102 = vmatprep.subr.mxu0 0.0
    %1103 = vmatpush1.msra.mxu0 0.0
    %1104 = vmatprep.subr.mxu0 0.0
    %1105 = vmatpush1.msra.mxu0 0.0
    %1106 = vmatprep.subr.mxu0 0.0
    %1107 = vmatpush1.msra.mxu0 0.0
    %1108 = vmatprep.subr.mxu0 0.0
    %1109 = vmatpush1.msra.mxu0 0.0
    %1110 = vmatprep.subr.mxu0 0.0
    %1111 = vmatpush1.msra.mxu0 0.0
    %1112 = vmatprep.subr.mxu0 0.0
    %1113 = vmatpush1.msra.mxu0 0.0
    %1114 = vmatprep.subr.mxu0 0.0
    %1115 = vmatpush1.msra.mxu0 0.0
    %1116 = vmatprep.subr.mxu0 0.0
    %1117 = vmatpush1.msra.mxu0 0.0
    %1118 = vmatprep.mubr.f32.mxu0 0.0
    %1119 = vmatmul.mubr.f32.gmra.mrb[0].mxu0 %v1049
    %v1120 = vpop.f32.mrb[0].mxu0
    %v1121 = vadd.f32 %v1041, %v1120
    %v1122 = vpop.f32.mrb[0].mxu0
    %1123 = vmatprep.mubr.f32.mxu0 0.0
    %1124 = vmatmul.mubr.f32.gmra.mrb[0].mxu0 %v1052
    %v1125 = vpop.f32.mrb[0].mxu0
    %v1126 = vadd.f32 %v1046, %v1125
    %v1127 = vpop.f32.mrb[0].mxu0
    %1128 = vdwg.mxu0
    %v1129 = vld [vmem:[%s5] sm:$0xff]
    %v1130 = vld [vmem:[%s5 + $0x8] sm:$0xff]
    %v1131 = vld [vmem:[%s5 + $0x10] sm:$0xff]
    %v1132 = vld [vmem:[%s5 + $0x18] sm:$0xff]
    %v1133 = vld [vmem:[%s5 + $0x20] sm:$0xff]
    %v1134 = vld [vmem:[%s5 + $0x28] sm:$0xff]
    %v1135 = vld [vmem:[%s5 + $0x30] sm:$0xff]
    %v1136 = vld [vmem:[%s5 + $0x38] sm:$0xff]
    %v1137 = vld [vmem:[%s5 + $0x40] sm:$0xff]
    %v1138 = vld [vmem:[%s5 + $0x48] sm:$0xff]
    %v1139 = vld [vmem:[%s6] sm:$0xff]
    %v1140 = vld [vmem:[%s6 + $0x8] sm:$0xff]
    %v1141 = vld [vmem:[%s6 + $0x10] sm:$0xff]
    %v1142 = vld [vmem:[%s6 + $0x18] sm:$0xff]
    %v1143 = vld [vmem:[%s6 + $0x20] sm:$0xff]
    %v1144 = vld [vmem:[%s6 + $0x28] sm:$0xff]
    %v1145 = vld [vmem:[%s6 + $0x30] sm:$0xff]
    %v1146 = vld [vmem:[%s6 + $0x38] sm:$0xff]
    %v1147 = vld [vmem:[%s6 + $0x40] sm:$0xff]
    %v1148 = vld [vmem:[%s6 + $0x48] sm:$0xff]
    %1150 = vset.pattern.permute.xlu0 0
    %1151 = vperm.xlu0 %1150, %v1139
    %v1152 = vpop.permute.xlu0 %1151
    %1155 = vset.pattern.permute.xlu0 0
    %1156 = vperm.xlu0 %1155, %v1140
    %v1157 = vpop.permute.xlu0 %1156
    %1160 = vset.pattern.permute.xlu0 0
    %1161 = vperm.xlu0 %1160, %v1141
    %v1162 = vpop.permute.xlu0 %1161
    %1165 = vset.pattern.permute.xlu0 0
    %1166 = vperm.xlu0 %1165, %v1142
    %v1167 = vpop.permute.xlu0 %1166
    %1170 = vset.pattern.permute.xlu0 0
    %1171 = vperm.xlu0 %1170, %v1143
    %v1172 = vpop.permute.xlu0 %1171
    %1175 = vset.pattern.permute.xlu0 0
    %1176 = vperm.xlu0 %1175, %v1144
    %v1177 = vpop.permute.xlu0 %1176
    %1180 = vset.pattern.permute.xlu0 0
    %1181 = vperm.xlu0 %1180, %v1145
    %v1182 = vpop.permute.xlu0 %1181
    %1185 = vset.pattern.permute.xlu0 0
    %1186 = vperm.xlu0 %1185, %v1146
    %v1187 = vpop.permute.xlu0 %1186
    %1190 = vset.pattern.permute.xlu0 0
    %1191 = vperm.xlu0 %1190, %v1147
    %v1192 = vpop.permute.xlu0 %1191
    %1195 = vset.pattern.permute.xlu0 0
    %1196 = vperm.xlu0 %1195, %v1148
    %v1197 = vpop.permute.xlu0 %1196
    %v1200 = vsel %vm131, %v1129, 0
    %v1203 = vsel %vm131, %v1130, 0
    %v1206 = vsel %vm131, %v1131, 0
    %v1209 = vsel %vm131, %v1132, 0
    %v1212 = vsel %vm131, %v1133, 0
    %v1215 = vsel %vm131, %v1134, 0
    %v1218 = vsel %vm131, %v1135, 0
    %v1221 = vsel %vm131, %v1136, 0
    %v1224 = vsel %vm131, %v1137, 0
    %v1227 = vsel %vm131, %v1138, 0
    %1229 = vmatprep.subr.mxu0 0.0
    %1230 = vmatpush1.msra.mxu0 %v1121
    %1231 = vmatprep.subr.mxu0 0.0
    %1232 = vmatpush1.msra.mxu0 %v1126
    %1233 = vmatprep.subr.mxu0 0.0
    %1234 = vmatpush1.msra.mxu0 0.0
    %1235 = vmatprep.subr.mxu0 0.0
    %1236 = vmatpush1.msra.mxu0 0.0
    %1237 = vmatprep.subr.mxu0 0.0
    %1238 = vmatpush1.msra.mxu0 0.0
    %1239 = vmatprep.subr.mxu0 0.0
    %1240 = vmatpush1.msra.mxu0 0.0
    %1241 = vmatprep.subr.mxu0 0.0
    %1242 = vmatpush1.msra.mxu0 0.0
    %1243 = vmatprep.subr.mxu0 0.0
    %1244 = vmatpush1.msra.mxu0 0.0
    %1245 = vmatprep.subr.mxu0 0.0
    %1246 = vmatpush1.msra.mxu0 0.0
    %1247 = vmatprep.subr.mxu0 0.0
    %1248 = vmatpush1.msra.mxu0 0.0
    %1249 = vmatprep.subr.mxu0 0.0
    %1250 = vmatpush1.msra.mxu0 0.0
    %1251 = vmatprep.subr.mxu0 0.0
    %1252 = vmatpush1.msra.mxu0 0.0
    %1253 = vmatprep.subr.mxu0 0.0
    %1254 = vmatpush1.msra.mxu0 0.0
    %1255 = vmatprep.subr.mxu0 0.0
    %1256 = vmatpush1.msra.mxu0 0.0
    %1257 = vmatprep.subr.mxu0 0.0
    %1258 = vmatpush1.msra.mxu0 0.0
    %1259 = vmatprep.subr.mxu0 0.0
    %1260 = vmatpush1.msra.mxu0 0.0
    %1261 = vmatprep.subr.mxu0 0.0
    %1262 = vmatpush1.msra.mxu0 0.0
    %1263 = vmatprep.subr.mxu0 0.0
    %1264 = vmatpush1.msra.mxu0 0.0
    %1265 = vmatprep.subr.mxu0 0.0
    %1266 = vmatpush1.msra.mxu0 0.0
    %1267 = vmatprep.subr.mxu0 0.0
    %1268 = vmatpush1.msra.mxu0 0.0
    %1269 = vmatprep.subr.mxu0 0.0
    %1270 = vmatpush1.msra.mxu0 0.0
    %1271 = vmatprep.subr.mxu0 0.0
    %1272 = vmatpush1.msra.mxu0 0.0
    %1273 = vmatprep.subr.mxu0 0.0
    %1274 = vmatpush1.msra.mxu0 0.0
    %1275 = vmatprep.subr.mxu0 0.0
    %1276 = vmatpush1.msra.mxu0 0.0
    %1277 = vmatprep.subr.mxu0 0.0
    %1278 = vmatpush1.msra.mxu0 0.0
    %1279 = vmatprep.subr.mxu0 0.0
    %1280 = vmatpush1.msra.mxu0 0.0
    %1281 = vmatprep.subr.mxu0 0.0
    %1282 = vmatpush1.msra.mxu0 0.0
    %1283 = vmatprep.subr.mxu0 0.0
    %1284 = vmatpush1.msra.mxu0 0.0
    %1285 = vmatprep.subr.mxu0 0.0
    %1286 = vmatpush1.msra.mxu0 0.0
    %1287 = vmatprep.subr.mxu0 0.0
    %1288 = vmatpush1.msra.mxu0 0.0
    %1289 = vmatprep.subr.mxu0 0.0
    %1290 = vmatpush1.msra.mxu0 0.0
    %1291 = vmatprep.subr.mxu0 0.0
    %1292 = vmatpush1.msra.mxu0 0.0
    %1293 = vmatprep.mubr.f32.mxu0 0.0
    %1294 = vmatmul.mubr.f32.gmra.mrb[0].mxu0 %v1200
    %v1295 = vpop.f32.mrb[0].mxu0
    %v1296 = vadd.f32 %v1152, %v1295
    %v1297 = vpop.f32.mrb[0].mxu0
    %1298 = vmatprep.mubr.f32.mxu0 0.0
    %1299 = vmatmul.mubr.f32.gmra.mrb[0].mxu0 %v1203
    %v1300 = vpop.f32.mrb[0].mxu0
    %v1301 = vadd.f32 %v1157, %v1300
    %v1302 = vpop.f32.mrb[0].mxu0
    %1303 = vmatprep.mubr.f32.mxu0 0.0
    %1304 = vmatmul.mubr.f32.gmra.mrb[0].mxu0 %v1206
    %v1305 = vpop.f32.mrb[0].mxu0
    %v1306 = vadd.f32 %v1162, %v1305
    %v1307 = vpop.f32.mrb[0].mxu0
    %1308 = vmatprep.mubr.f32.mxu0 0.0
    %1309 = vmatmul.mubr.f32.gmra.mrb[0].mxu0 %v1209
    %v1310 = vpop.f32.mrb[0].mxu0
    %v1311 = vadd.f32 %v1167, %v1310
    %v1312 = vpop.f32.mrb[0].mxu0
    %1313 = vmatprep.mubr.f32.mxu0 0.0
    %1314 = vmatmul.mubr.f32.gmra.mrb[0].mxu0 %v1212
    %v1315 = vpop.f32.mrb[0].mxu0
    %v1316 = vadd.f32 %v1172, %v1315
    %v1317 = vpop.f32.mrb[0].mxu0
    %1318 = vmatprep.mubr.f32.mxu0 0.0
    %1319 = vmatmul.mubr.f32.gmra.mrb[0].mxu0 %v1215
    %v1320 = vpop.f32.mrb[0].mxu0
    %v1321 = vadd.f32 %v1177, %v1320
    %v1322 = vpop.f32.mrb[0].mxu0
    %1323 = vmatprep.mubr.f32.mxu0 0.0
    %1324 = vmatmul.mubr.f32.gmra.mrb[0].mxu0 %v1218
    %v1325 = vpop.f32.mrb[0].mxu0
    %v1326 = vadd.f32 %v1182, %v1325
    %v1327 = vpop.f32.mrb[0].mxu0
    %1328 = vmatprep.mubr.f32.mxu0 0.0
    %1329 = vmatmul.mubr.f32.gmra.mrb[0].mxu0 %v1221
    %v1330 = vpop.f32.mrb[0].mxu0
    %v1331 = vadd.f32 %v1187, %v1330
    %v1332 = vpop.f32.mrb[0].mxu0
    %1333 = vmatprep.mubr.f32.mxu0 0.0
    %1334 = vmatmul.mubr.f32.gmra.mrb[0].mxu0 %v1224
    %v1335 = vpop.f32.mrb[0].mxu0
    %v1336 = vadd.f32 %v1192, %v1335
    %v1337 = vpop.f32.mrb[0].mxu0
    %1338 = vmatprep.mubr.f32.mxu0 0.0
    %1339 = vmatmul.mubr.f32.gmra.mrb[0].mxu0 %v1227
    %v1340 = vpop.f32.mrb[0].mxu0
    %v1341 = vadd.f32 %v1197, %v1340
    %v1342 = vpop.f32.mrb[0].mxu0
    %1343 = vdwg.mxu0
    %v1344 = vmax.f32 %v1296, 0.0
    %v1345 = vmax.f32 %v1301, 0.0
    %v1346 = vmax.f32 %v1306, 0.0
    %v1347 = vmax.f32 %v1311, 0.0
    %v1348 = vmax.f32 %v1316, 0.0
    %v1349 = vmax.f32 %v1321, 0.0
    %v1350 = vmax.f32 %v1326, 0.0
    %v1351 = vmax.f32 %v1331, 0.0
    %v1352 = vmax.f32 %v1336, 0.0
    %v1353 = vmax.f32 %v1341, 0.0
    %v1354 = vld [vmem:[%s7] sm:$0xff]
    %v1355 = vld [vmem:[%s8] sm:$0xff]
    %1357 = vset.pattern.permute.xlu0 0
    %1358 = vperm.xlu0 %1357, %v1355
    %v1359 = vpop.permute.xlu0 %1358
    %vm1361 = vcmask 654336
    %v1363 = vsel %vm1361, %v1354, 0
    %1365 = vmatprep.subr.mxu0 0.0
    %1366 = vmatpush1.msra.mxu0 %v1344
    %1367 = vmatprep.subr.mxu0 0.0
    %1368 = vmatpush1.msra.mxu0 %v1345
    %1369 = vmatprep.subr.mxu0 0.0
    %1370 = vmatpush1.msra.mxu0 %v1346
    %1371 = vmatprep.subr.mxu0 0.0
    %1372 = vmatpush1.msra.mxu0 %v1347
    %1373 = vmatprep.subr.mxu0 0.0
    %1374 = vmatpush1.msra.mxu0 %v1348
    %1375 = vmatprep.subr.mxu0 0.0
    %1376 = vmatpush1.msra.mxu0 %v1349
    %1377 = vmatprep.subr.mxu0 0.0
    %1378 = vmatpush1.msra.mxu0 %v1350
    %1379 = vmatprep.subr.mxu0 0.0
    %1380 = vmatpush1.msra.mxu0 %v1351
    %1381 = vmatprep.subr.mxu0 0.0
    %1382 = vmatpush1.msra.mxu0 %v1352
    %1383 = vmatprep.subr.mxu0 0.0
    %1384 = vmatpush1.msra.mxu0 %v1353
    %1385 = vmatprep.subr.mxu0 0.0
    %1386 = vmatpush1.msra.mxu0 0.0
    %1387 = vmatprep.subr.mxu0 0.0
    %1388 = vmatpush1.msra.mxu0 0.0
    %1389 = vmatprep.subr.mxu0 0.0
    %1390 = vmatpush1.msra.mxu0 0.0
    %1391 = vmatprep.subr.mxu0 0.0
    %1392 = vmatpush1.msra.mxu0 0.0
    %1393 = vmatprep.subr.mxu0 0.0
    %1394 = vmatpush1.msra.mxu0 0.0
    %1395 = vmatprep.subr.mxu0 0.0
    %1396 = vmatpush1.msra.mxu0 0.0
    %1397 = vmatprep.subr.mxu0 0.0
    %1398 = vmatpush1.msra.mxu0 0.0
    %1399 = vmatprep.subr.mxu0 0.0
    %1400 = vmatpush1.msra.mxu0 0.0
    %1401 = vmatprep.subr.mxu0 0.0
    %1402 = vmatpush1.msra.mxu0 0.0
    %1403 = vmatprep.subr.mxu0 0.0
    %1404 = vmatpush1.msra.mxu0 0.0
    %1405 = vmatprep.subr.mxu0 0.0
    %1406 = vmatpush1.msra.mxu0 0.0
    %1407 = vmatprep.subr.mxu0 0.0
    %1408 = vmatpush1.msra.mxu0 0.0
    %1409 = vmatprep.subr.mxu0 0.0
    %1410 = vmatpush1.msra.mxu0 0.0
    %1411 = vmatprep.subr.mxu0 0.0
    %1412 = vmatpush1.msra.mxu0 0.0
    %1413 = vmatprep.subr.mxu0 0.0
    %1414 = vmatpush1.msra.mxu0 0.0
    %1415 = vmatprep.subr.mxu0 0.0
    %1416 = vmatpush1.msra.mxu0 0.0
    %1417 = vmatprep.subr.mxu0 0.0
    %1418 = vmatpush1.msra.mxu0 0.0
    %1419 = vmatprep.subr.mxu0 0.0
    %1420 = vmatpush1.msra.mxu0 0.0
    %1421 = vmatprep.subr.mxu0 0.0
    %1422 = vmatpush1.msra.mxu0 0.0
    %1423 = vmatprep.subr.mxu0 0.0
    %1424 = vmatpush1.msra.mxu0 0.0
    %1425 = vmatprep.subr.mxu0 0.0
    %1426 = vmatpush1.msra.mxu0 0.0
    %1427 = vmatprep.subr.mxu0 0.0
    %1428 = vmatpush1.msra.mxu0 0.0
    %1429 = vmatprep.mubr.f32.mxu0 0.0
    %1430 = vmatmul.mubr.f32.gmra.mrb[0].mxu0 %v1363
    %v1431 = vpop.f32.mrb[0].mxu0
    %v1432 = vadd.f32 %v1359, %v1431
    %v1433 = vpop.f32.mrb[0].mxu0
    %1434 = vdwg.mxu0
    %v1435 = vld [vmem:[%s9] sm:$0xff]
    %v1436 = vld [vmem:[%s9 + $0x8] sm:$0xff]
    %v1437 = vld [vmem:[%s9 + $0x10] sm:$0xff]
    %v1438 = vld [vmem:[%s9 + $0x18] sm:$0xff]
    %v1439 = vld [vmem:[%s9 + $0x20] sm:$0xff]
    %v1440 = vld [vmem:[%s10] sm:$0xff]
    %v1441 = vld [vmem:[%s10 + $0x8] sm:$0xff]
    %v1442 = vld [vmem:[%s10 + $0x10] sm:$0xff]
    %v1443 = vld [vmem:[%s10 + $0x18] sm:$0xff]
    %v1444 = vld [vmem:[%s10 + $0x20] sm:$0xff]
    %1446 = vset.pattern.permute.xlu0 0
    %1447 = vperm.xlu0 %1446, %v1440
    %v1448 = vpop.permute.xlu0 %1447
    %1451 = vset.pattern.permute.xlu0 0
    %1452 = vperm.xlu0 %1451, %v1441
    %v1453 = vpop.permute.xlu0 %1452
    %1456 = vset.pattern.permute.xlu0 0
    %1457 = vperm.xlu0 %1456, %v1442
    %v1458 = vpop.permute.xlu0 %1457
    %1461 = vset.pattern.permute.xlu0 0
    %1462 = vperm.xlu0 %1461, %v1443
    %v1463 = vpop.permute.xlu0 %1462
    %1466 = vset.pattern.permute.xlu0 0
    %1467 = vperm.xlu0 %1466, %v1444
    %v1468 = vpop.permute.xlu0 %1467
    %vm1470 = vcmask 64512
    %v1472 = vsel %vm1470, %v1435, 0
    %v1475 = vsel %vm1470, %v1436, 0
    %v1478 = vsel %vm1470, %v1437, 0
    %v1481 = vsel %vm1470, %v1438, 0
    %v1484 = vsel %vm1470, %v1439, 0
    %1486 = vmatprep.subr.mxu0 0.0
    %1487 = vmatpush1.msra.mxu0 %v1432
    %1488 = vmatprep.subr.mxu0 0.0
    %1489 = vmatpush1.msra.mxu0 0.0
    %1490 = vmatprep.subr.mxu0 0.0
    %1491 = vmatpush1.msra.mxu0 0.0
    %1492 = vmatprep.subr.mxu0 0.0
    %1493 = vmatpush1.msra.mxu0 0.0
    %1494 = vmatprep.subr.mxu0 0.0
    %1495 = vmatpush1.msra.mxu0 0.0
    %1496 = vmatprep.subr.mxu0 0.0
    %1497 = vmatpush1.msra.mxu0 0.0
    %1498 = vmatprep.subr.mxu0 0.0
    %1499 = vmatpush1.msra.mxu0 0.0
    %1500 = vmatprep.subr.mxu0 0.0
    %1501 = vmatpush1.msra.mxu0 0.0
    %1502 = vmatprep.subr.mxu0 0.0
    %1503 = vmatpush1.msra.mxu0 0.0
    %1504 = vmatprep.subr.mxu0 0.0
    %1505 = vmatpush1.msra.mxu0 0.0
    %1506 = vmatprep.subr.mxu0 0.0
    %1507 = vmatpush1.msra.mxu0 0.0
    %1508 = vmatprep.subr.mxu0 0.0
    %1509 = vmatpush1.msra.mxu0 0.0
    %1510 = vmatprep.subr.mxu0 0.0
    %1511 = vmatpush1.msra.mxu0 0.0
    %1512 = vmatprep.subr.mxu0 0.0
    %1513 = vmatpush1.msra.mxu0 0.0
    %1514 = vmatprep.subr.mxu0 0.0
    %1515 = vmatpush1.msra.mxu0 0.0
    %1516 = vmatprep.subr.mxu0 0.0
    %1517 = vmatpush1.msra.mxu0 0.0
    %1518 = vmatprep.subr.mxu0 0.0
    %1519 = vmatpush1.msra.mxu0 0.0
    %1520 = vmatprep.subr.mxu0 0.0
    %1521 = vmatpush1.msra.mxu0 0.0
    %1522 = vmatprep.subr.mxu0 0.0
    %1523 = vmatpush1.msra.mxu0 0.0
    %1524 = vmatprep.subr.mxu0 0.0
    %1525 = vmatpush1.msra.mxu0 0.0
    %1526 = vmatprep.subr.mxu0 0.0
    %1527 = vmatpush1.msra.mxu0 0.0
    %1528 = vmatprep.subr.mxu0 0.0
    %1529 = vmatpush1.msra.mxu0 0.0
    %1530 = vmatprep.subr.mxu0 0.0
    %1531 = vmatpush1.msra.mxu0 0.0
    %1532 = vmatprep.subr.mxu0 0.0
    %1533 = vmatpush1.msra.mxu0 0.0
    %1534 = vmatprep.subr.mxu0 0.0
    %1535 = vmatpush1.msra.mxu0 0.0
    %1536 = vmatprep.subr.mxu0 0.0
    %1537 = vmatpush1.msra.mxu0 0.0
    %1538 = vmatprep.subr.mxu0 0.0
    %1539 = vmatpush1.msra.mxu0 0.0
    %1540 = vmatprep.subr.mxu0 0.0
    %1541 = vmatpush1.msra.mxu0 0.0
    %1542 = vmatprep.subr.mxu0 0.0
    %1543 = vmatpush1.msra.mxu0 0.0
    %1544 = vmatprep.subr.mxu0 0.0
    %1545 = vmatpush1.msra.mxu0 0.0
    %1546 = vmatprep.subr.mxu0 0.0
    %1547 = vmatpush1.msra.mxu0 0.0
    %1548 = vmatprep.subr.mxu0 0.0
    %1549 = vmatpush1.msra.mxu0 0.0
    %1550 = vmatprep.mubr.f32.mxu0 0.0
    %1551 = vmatmul.mubr.f32.gmra.mrb[0].mxu0 %v1472
    %v1552 = vpop.f32.mrb[0].mxu0
    %v1553 = vadd.f32 %v1448, %v1552
    %v1554 = vpop.f32.mrb[0].mxu0
    %1555 = vmatprep.mubr.f32.mxu0 0.0
    %1556 = vmatmul.mubr.f32.gmra.mrb[0].mxu0 %v1475
    %v1557 = vpop.f32.mrb[0].mxu0
    %v1558 = vadd.f32 %v1453, %v1557
    %v1559 = vpop.f32.mrb[0].mxu0
    %1560 = vmatprep.mubr.f32.mxu0 0.0
    %1561 = vmatmul.mubr.f32.gmra.mrb[0].mxu0 %v1478
    %v1562 = vpop.f32.mrb[0].mxu0
    %v1563 = vadd.f32 %v1458, %v1562
    %v1564 = vpop.f32.mrb[0].mxu0
    %1565 = vmatprep.mubr.f32.mxu0 0.0
    %1566 = vmatmul.mubr.f32.gmra.mrb[0].mxu0 %v1481
    %v1567 = vpop.f32.mrb[0].mxu0
    %v1568 = vadd.f32 %v1463, %v1567
    %v1569 = vpop.f32.mrb[0].mxu0
    %1570 = vmatprep.mubr.f32.mxu0 0.0
    %1571 = vmatmul.mubr.f32.gmra.mrb[0].mxu0 %v1484
    %v1572 = vpop.f32.mrb[0].mxu0
    %v1573 = vadd.f32 %v1468, %v1572
    %v1574 = vpop.f32.mrb[0].mxu0
    %1575 = vdwg.mxu0
    %v1576 = vmax.f32 %v1553, 0.0
    %v1577 = vmax.f32 %v1558, 0.0
    %v1578 = vmax.f32 %v1563, 0.0
    %v1579 = vmax.f32 %v1568, 0.0
    %v1580 = vmax.f32 %v1573, 0.0
    %v1581 = vld [vmem:[%s11] sm:$0xff]
    %v1582 = vld [vmem:[%s12] sm:$0xff]
    %1584 = vset.pattern.permute.xlu0 0
    %1585 = vperm.xlu0 %1584, %v1582
    %v1586 = vpop.permute.xlu0 %1585
    %vm1588 = vcmask 326656
    %v1590 = vsel %vm1588, %v1581, 0
    %1592 = vmatprep.subr.mxu0 0.0
    %1593 = vmatpush1.msra.mxu0 %v1576
    %1594 = vmatprep.subr.mxu0 0.0
    %1595 = vmatpush1.msra.mxu0 %v1577
    %1596 = vmatprep.subr.mxu0 0.0
    %1597 = vmatpush1.msra.mxu0 %v1578
    %1598 = vmatprep.subr.mxu0 0.0
    %1599 = vmatpush1.msra.mxu0 %v1579
    %1600 = vmatprep.subr.mxu0 0.0
    %1601 = vmatpush1.msra.mxu0 %v1580
    %1602 = vmatprep.subr.mxu0 0.0
    %1603 = vmatpush1.msra.mxu0 0.0
    %1604 = vmatprep.subr.mxu0 0.0
    %1605 = vmatpush1.msra.mxu0 0.0
    %1606 = vmatprep.subr.mxu0 0.0
    %1607 = vmatpush1.msra.mxu0 0.0
    %1608 = vmatprep.subr.mxu0 0.0
    %1609 = vmatpush1.msra.mxu0 0.0
    %1610 = vmatprep.subr.mxu0 0.0
    %1611 = vmatpush1.msra.mxu0 0.0
    %1612 = vmatprep.subr.mxu0 0.0
    %1613 = vmatpush1.msra.mxu0 0.0
    %1614 = vmatprep.subr.mxu0 0.0
    %1615 = vmatpush1.msra.mxu0 0.0
    %1616 = vmatprep.subr.mxu0 0.0
    %1617 = vmatpush1.msra.mxu0 0.0
    %1618 = vmatprep.subr.mxu0 0.0
    %1619 = vmatpush1.msra.mxu0 0.0
    %1620 = vmatprep.subr.mxu0 0.0
    %1621 = vmatpush1.msra.mxu0 0.0
    %1622 = vmatprep.subr.mxu0 0.0
    %1623 = vmatpush1.msra.mxu0 0.0
    %1624 = vmatprep.subr.mxu0 0.0
    %1625 = vmatpush1.msra.mxu0 0.0
    %1626 = vmatprep.subr.mxu0 0.0
    %1627 = vmatpush1.msra.mxu0 0.0
    %1628 = vmatprep.subr.mxu0 0.0
    %1629 = vmatpush1.msra.mxu0 0.0
    %1630 = vmatprep.subr.mxu0 0.0
    %1631 = vmatpush1.msra.mxu0 0.0
    %1632 = vmatprep.subr.mxu0 0.0
    %1633 = vmatpush1.msra.mxu0 0.0
    %1634 = vmatprep.subr.mxu0 0.0
    %1635 = vmatpush1.msra.mxu0 0.0
    %1636 = vmatprep.subr.mxu0 0.0
    %1637 = vmatpush1.msra.mxu0 0.0
    %1638 = vmatprep.subr.mxu0 0.0
    %1639 = vmatpush1.msra.mxu0 0.0
    %1640 = vmatprep.subr.mxu0 0.0
    %1641 = vmatpush1.msra.mxu0 0.0
    %1642 = vmatprep.subr.mxu0 0.0
    %1643 = vmatpush1.msra.mxu0 0.0
    %1644 = vmatprep.subr.mxu0 0.0
    %1645 = vmatpush1.msra.mxu0 0.0
    %1646 = vmatprep.subr.mxu0 0.0
    %1647 = vmatpush1.msra.mxu0 0.0
    %1648 = vmatprep.subr.mxu0 0.0
    %1649 = vmatpush1.msra.mxu0 0.0
    %1650 = vmatprep.subr.mxu0 0.0
    %1651 = vmatpush1.msra.mxu0 0.0
    %1652 = vmatprep.subr.mxu0 0.0
    %1653 = vmatpush1.msra.mxu0 0.0
    %1654 = vmatprep.subr.mxu0 0.0
    %1655 = vmatpush1.msra.mxu0 0.0
    %1656 = vmatprep.mubr.f32.mxu0 0.0
    %1657 = vmatmul.mubr.f32.gmra.mrb[0].mxu0 %v1590
    %v1658 = vpop.f32.mrb[0].mxu0
    %v1659 = vadd.f32 %v1586, %v1658
    %v1660 = vpop.f32.mrb[0].mxu0
    %1661 = vdwg.mxu0
    %1662 = vst.msk [vmem:[#allocation2] sm:$0xff] %vm505, %v1659
    %1663 = vst.msk [vmem:[#allocation2 + $0x8] sm:$0xff] %vm505, %v1432
    %v1666 = vcombine.high %v275, %v275
    %v1668 = vunpack.c.l.s4 1966171168
    %v1669 = vunpack.c.0.s8 %v1668
    %v1670 = vlaneseq
    %v1671 = vshrl.u32 %v1670, 7
    %v1672 = vsub.s32 %v1669, %v1671
    %v1673 = vrot.slane %v275, %v1672
    %v1675 = vunpack.c.l.s4 1966171168
    %v1676 = vunpack.c.0.s8 %v1675
    %v1677 = vlaneseq
    %v1678 = vshrl.u32 %v1677, 7
    %v1679 = vsub.s32 %v1676, %v1678
    %v1680 = vrot.slane %v1666, %v1679
    %v1681 = vcombine.high %v1673, %v1673
    %v1682 = vcombine.high %v1680, %v1680
    %v1684 = vunpack.c.l.s4 1966171168
    %v1685 = vunpack.c.0.s8 %v1684
    %v1686 = vlaneseq
    %v1687 = vshrl.u32 %v1686, 7
    %v1688 = vsub.s32 %v1685, %v1687
    %v1689 = vrot.slane %v1673, %v1688
    %v1691 = vunpack.c.l.s4 1966171168
    %v1692 = vunpack.c.0.s8 %v1691
    %v1693 = vlaneseq
    %v1694 = vshrl.u32 %v1693, 7
    %v1695 = vsub.s32 %v1692, %v1694
    %v1696 = vrot.slane %v1680, %v1695
    %v1698 = vunpack.c.l.s4 1966171168
    %v1699 = vunpack.c.0.s8 %v1698
    %v1700 = vlaneseq
    %v1701 = vshrl.u32 %v1700, 7
    %v1702 = vsub.s32 %v1699, %v1701
    %v1703 = vrot.slane %v1681, %v1702
    %v1705 = vunpack.c.l.s4 1966171168
    %v1706 = vunpack.c.0.s8 %v1705
    %v1707 = vlaneseq
    %v1708 = vshrl.u32 %v1707, 7
    %v1709 = vsub.s32 %v1706, %v1708
    %v1710 = vrot.slane %v1682, %v1709
    %v1711 = vcombine.high %v1689, %v1689
    %v1712 = vcombine.high %v1696, %v1696
    %v1713 = vcombine.high %v1703, %v1703
    %v1714 = vcombine.high %v1710, %v1710
    %v1715 = vcombine.high %v280, %v280
    %v1717 = vunpack.c.l.s4 1966171168
    %v1718 = vunpack.c.0.s8 %v1717
    %v1719 = vlaneseq
    %v1720 = vshrl.u32 %v1719, 7
    %v1721 = vsub.s32 %v1718, %v1720
    %v1722 = vrot.slane %v280, %v1721
    %v1724 = vunpack.c.l.s4 1966171168
    %v1725 = vunpack.c.0.s8 %v1724
    %v1726 = vlaneseq
    %v1727 = vshrl.u32 %v1726, 7
    %v1728 = vsub.s32 %v1725, %v1727
    %v1729 = vrot.slane %v1715, %v1728
    %v1730 = vcombine.high %v1722, %v1722
    %v1731 = vcombine.high %v1729, %v1729
    %v1733 = vunpack.c.l.s4 1966171168
    %v1734 = vunpack.c.0.s8 %v1733
    %v1735 = vlaneseq
    %v1736 = vshrl.u32 %v1735, 7
    %v1737 = vsub.s32 %v1734, %v1736
    %v1738 = vrot.slane %v1722, %v1737
    %v1740 = vunpack.c.l.s4 1966171168
    %v1741 = vunpack.c.0.s8 %v1740
    %v1742 = vlaneseq
    %v1743 = vshrl.u32 %v1742, 7
    %v1744 = vsub.s32 %v1741, %v1743
    %v1745 = vrot.slane %v1729, %v1744
    %v1747 = vunpack.c.l.s4 1966171168
    %v1748 = vunpack.c.0.s8 %v1747
    %v1749 = vlaneseq
    %v1750 = vshrl.u32 %v1749, 7
    %v1751 = vsub.s32 %v1748, %v1750
    %v1752 = vrot.slane %v1730, %v1751
    %v1754 = vunpack.c.l.s4 1966171168
    %v1755 = vunpack.c.0.s8 %v1754
    %v1756 = vlaneseq
    %v1757 = vshrl.u32 %v1756, 7
    %v1758 = vsub.s32 %v1755, %v1757
    %v1759 = vrot.slane %v1731, %v1758
    %v1760 = vcombine.high %v1738, %v1738
    %v1761 = vcombine.high %v1745, %v1745
    %v1762 = vcombine.high %v1752, %v1752
    %v1763 = vcombine.high %v1759, %v1759
    %v1764 = vlaneseq
    %v1765 = vshrl.u32 %v1764, 7
    %v1766 = vsub.s32 0, %v1765
    %v1767 = vrot.slane %v1689, %v1766
    %v1768 = vlaneseq
    %v1769 = vshrl.u32 %v1768, 7
    %v1770 = vsub.s32 0, %v1769
    %v1771 = vrot.slane %v1703, %v1770
    %v1772 = vlaneseq
    %v1773 = vshrl.u32 %v1772, 7
    %v1774 = vsub.s32 0, %v1773
    %v1775 = vrot.slane %v1711, %v1774
    %v1776 = vlaneseq
    %v1777 = vshrl.u32 %v1776, 7
    %v1778 = vsub.s32 0, %v1777
    %v1779 = vrot.slane %v1713, %v1778
    %v1780 = vlaneseq
    %v1781 = vshrl.u32 %v1780, 7
    %v1782 = vsub.s32 0, %v1781
    %v1783 = vrot.slane %v1696, %v1782
    %v1784 = vlaneseq
    %v1785 = vshrl.u32 %v1784, 7
    %v1786 = vsub.s32 0, %v1785
    %v1787 = vrot.slane %v1710, %v1786
    %v1788 = vlaneseq
    %v1789 = vshrl.u32 %v1788, 7
    %v1790 = vsub.s32 0, %v1789
    %v1791 = vrot.slane %v1712, %v1790
    %v1792 = vlaneseq
    %v1793 = vshrl.u32 %v1792, 7
    %v1794 = vsub.s32 0, %v1793
    %v1795 = vrot.slane %v1714, %v1794
    %v1796 = vlaneseq
    %v1797 = vshrl.u32 %v1796, 7
    %v1798 = vsub.s32 0, %v1797
    %v1799 = vrot.slane %v1738, %v1798
    %v1800 = vlaneseq
    %v1801 = vshrl.u32 %v1800, 7
    %v1802 = vsub.s32 0, %v1801
    %v1803 = vrot.slane %v1752, %v1802
    %v1804 = vlaneseq
    %v1805 = vshrl.u32 %v1804, 7
    %v1806 = vsub.s32 0, %v1805
    %v1807 = vrot.slane %v1760, %v1806
    %v1808 = vlaneseq
    %v1809 = vshrl.u32 %v1808, 7
    %v1810 = vsub.s32 0, %v1809
    %v1811 = vrot.slane %v1762, %v1810
    %v1812 = vlaneseq
    %v1813 = vshrl.u32 %v1812, 7
    %v1814 = vsub.s32 0, %v1813
    %v1815 = vrot.slane %v1745, %v1814
    %v1816 = vlaneseq
    %v1817 = vshrl.u32 %v1816, 7
    %v1818 = vsub.s32 0, %v1817
    %v1819 = vrot.slane %v1759, %v1818
    %v1820 = vlaneseq
    %v1821 = vshrl.u32 %v1820, 7
    %v1822 = vsub.s32 0, %v1821
    %v1823 = vrot.slane %v1761, %v1822
    %v1824 = vlaneseq
    %v1825 = vshrl.u32 %v1824, 7
    %v1826 = vsub.s32 0, %v1825
    %v1827 = vrot.slane %v1763, %v1826
    %v1844 = vmul.f32 %v1767, %v265
    %v1845 = vmul.f32 %v1767, %v270
    %v1846 = vmul.f32 %v1771, %v265
    %v1847 = vmul.f32 %v1771, %v270
    %v1848 = vmul.f32 %v1775, %v265
    %v1849 = vmul.f32 %v1775, %v270
    %v1850 = vmul.f32 %v1779, %v265
    %v1851 = vmul.f32 %v1779, %v270
    %v1852 = vmul.f32 %v1783, %v265
    %v1853 = vmul.f32 %v1783, %v270
    %v1854 = vmul.f32 %v1787, %v265
    %v1855 = vmul.f32 %v1787, %v270
    %v1856 = vmul.f32 %v1791, %v265
    %v1857 = vmul.f32 %v1791, %v270
    %v1858 = vmul.f32 %v1795, %v265
    %v1859 = vmul.f32 %v1795, %v270
    %v1860 = vmul.f32 %v1799, %v265
    %v1861 = vmul.f32 %v1799, %v270
    %v1862 = vmul.f32 %v1803, %v265
    %v1863 = vmul.f32 %v1803, %v270
    %v1864 = vmul.f32 %v1807, %v265
    %v1865 = vmul.f32 %v1807, %v270
    %v1866 = vmul.f32 %v1811, %v265
    %v1867 = vmul.f32 %v1811, %v270
    %v1868 = vmul.f32 %v1815, %v265
    %v1869 = vmul.f32 %v1815, %v270
    %v1870 = vmul.f32 %v1819, %v265
    %v1871 = vmul.f32 %v1819, %v270
    %v1872 = vmul.f32 %v1823, %v265
    %v1873 = vmul.f32 %v1823, %v270
    %v1874 = vmul.f32 %v1827, %v265
    %v1875 = vmul.f32 %v1827, %v270
    %v1876 = vsel %vm505, %v1844, -inf
    %v1877 = vsel %vm505, %v1846, -inf
    %v1878 = vsel %vm505, %v1848, -inf
    %v1879 = vmax.f32 %v1876, %v1878
    %v1880 = vsel %vm505, %v1850, -inf
    %v1881 = vmax.f32 %v1877, %v1880
    %v1882 = vsel %vm505, %v1852, -inf
    %v1883 = vmax.f32 %v1879, %v1882
    %v1884 = vsel %vm505, %v1854, -inf
    %v1885 = vmax.f32 %v1881, %v1884
    %v1886 = vsel %vm505, %v1856, -inf
    %v1887 = vmax.f32 %v1883, %v1886
    %v1888 = vsel %vm505, %v1858, -inf
    %v1889 = vmax.f32 %v1885, %v1888
    %v1890 = vsel %vm505, %v1860, -inf
    %v1891 = vmax.f32 %v1887, %v1890
    %v1892 = vsel %vm505, %v1862, -inf
    %v1893 = vmax.f32 %v1889, %v1892
    %v1894 = vsel %vm505, %v1864, -inf
    %v1895 = vmax.f32 %v1891, %v1894
    %v1896 = vsel %vm505, %v1866, -inf
    %v1897 = vmax.f32 %v1893, %v1896
    %v1898 = vsel %vm505, %v1868, -inf
    %v1899 = vmax.f32 %v1895, %v1898
    %v1900 = vsel %vm505, %v1870, -inf
    %v1901 = vmax.f32 %v1897, %v1900
    %v1902 = vsel %vm505, %v1872, -inf
    %v1903 = vmax.f32 %v1899, %v1902
    %v1904 = vsel %vm505, %v1874, -inf
    %v1905 = vmax.f32 %v1901, %v1904
    %v1906 = vmax.f32 %v1903, %v1905
    %v1907 = vsel %vm505, %v1845, -inf
    %v1908 = vsel %vm505, %v1847, -inf
    %v1909 = vsel %vm505, %v1849, -inf
    %v1910 = vmax.f32 %v1907, %v1909
    %v1911 = vsel %vm505, %v1851, -inf
    %v1912 = vmax.f32 %v1908, %v1911
    %v1913 = vsel %vm505, %v1853, -inf
    %v1914 = vmax.f32 %v1910, %v1913
    %v1915 = vsel %vm505, %v1855, -inf
    %v1916 = vmax.f32 %v1912, %v1915
    %v1917 = vsel %vm505, %v1857, -inf
    %v1918 = vmax.f32 %v1914, %v1917
    %v1919 = vsel %vm505, %v1859, -inf
    %v1920 = vmax.f32 %v1916, %v1919
    %v1921 = vsel %vm505, %v1861, -inf
    %v1922 = vmax.f32 %v1918, %v1921
    %v1923 = vsel %vm505, %v1863, -inf
    %v1924 = vmax.f32 %v1920, %v1923
    %v1925 = vsel %vm505, %v1865, -inf
    %v1926 = vmax.f32 %v1922, %v1925
    %v1927 = vsel %vm505, %v1867, -inf
    %v1928 = vmax.f32 %v1924, %v1927
    %v1929 = vsel %vm505, %v1869, -inf
    %v1930 = vmax.f32 %v1926, %v1929
    %v1931 = vsel %vm505, %v1871, -inf
    %v1932 = vmax.f32 %v1928, %v1931
    %v1933 = vsel %vm505, %v1873, -inf
    %v1934 = vmax.f32 %v1930, %v1933
    %v1935 = vsel %vm505, %v1875, -inf
    %v1936 = vmax.f32 %v1932, %v1935
    %v1937 = vmax.f32 %v1934, %v1936
    %v1938 = vsub.f32 %v1844, %v1906
    %v1939 = vsub.f32 %v1845, %v1937
    %v1940 = vsub.f32 %v1846, %v1906
    %v1941 = vsub.f32 %v1847, %v1937
    %v1942 = vsub.f32 %v1848, %v1906
    %v1943 = vsub.f32 %v1849, %v1937
    %v1944 = vsub.f32 %v1850, %v1906
    %v1945 = vsub.f32 %v1851, %v1937
    %v1946 = vsub.f32 %v1852, %v1906
    %v1947 = vsub.f32 %v1853, %v1937
    %v1948 = vsub.f32 %v1854, %v1906
    %v1949 = vsub.f32 %v1855, %v1937
    %v1950 = vsub.f32 %v1856, %v1906
    %v1951 = vsub.f32 %v1857, %v1937
    %v1952 = vsub.f32 %v1858, %v1906
    %v1953 = vsub.f32 %v1859, %v1937
    %v1954 = vsub.f32 %v1860, %v1906
    %v1955 = vsub.f32 %v1861, %v1937
    %v1956 = vsub.f32 %v1862, %v1906
    %v1957 = vsub.f32 %v1863, %v1937
    %v1958 = vsub.f32 %v1864, %v1906
    %v1959 = vsub.f32 %v1865, %v1937
    %v1960 = vsub.f32 %v1866, %v1906
    %v1961 = vsub.f32 %v1867, %v1937
    %v1962 = vsub.f32 %v1868, %v1906
    %v1963 = vsub.f32 %v1869, %v1937
    %v1964 = vsub.f32 %v1870, %v1906
    %v1965 = vsub.f32 %v1871, %v1937
    %v1966 = vsub.f32 %v1872, %v1906
    %v1967 = vsub.f32 %v1873, %v1937
    %v1968 = vsub.f32 %v1874, %v1906
    %v1969 = vsub.f32 %v1875, %v1937
    %v1970 = vmul.f32 %v1938, 1.442695
    %v1971 = vpow.pop %v1970
    %v1972 = vmul.f32 %v1939, 1.442695
    %v1973 = vpow.pop %v1972
    %v1974 = vmul.f32 %v1940, 1.442695
    %v1975 = vpow.pop %v1974
    %v1976 = vmul.f32 %v1941, 1.442695
    %v1977 = vpow.pop %v1976
    %v1978 = vmul.f32 %v1942, 1.442695
    %v1979 = vpow.pop %v1978
    %v1980 = vmul.f32 %v1943, 1.442695
    %v1981 = vpow.pop %v1980
    %v1982 = vmul.f32 %v1944, 1.442695
    %v1983 = vpow.pop %v1982
    %v1984 = vmul.f32 %v1945, 1.442695
    %v1985 = vpow.pop %v1984
    %v1986 = vmul.f32 %v1946, 1.442695
    %v1987 = vpow.pop %v1986
    %v1988 = vmul.f32 %v1947, 1.442695
    %v1989 = vpow.pop %v1988
    %v1990 = vmul.f32 %v1948, 1.442695
    %v1991 = vpow.pop %v1990
    %v1992 = vmul.f32 %v1949, 1.442695
    %v1993 = vpow.pop %v1992
    %v1994 = vmul.f32 %v1950, 1.442695
    %v1995 = vpow.pop %v1994
    %v1996 = vmul.f32 %v1951, 1.442695
    %v1997 = vpow.pop %v1996
    %v1998 = vmul.f32 %v1952, 1.442695
    %v1999 = vpow.pop %v1998
    %v2000 = vmul.f32 %v1953, 1.442695
    %v2001 = vpow.pop %v2000
    %v2002 = vmul.f32 %v1954, 1.442695
    %v2003 = vpow.pop %v2002
    %v2004 = vmul.f32 %v1955, 1.442695
    %v2005 = vpow.pop %v2004
    %v2006 = vmul.f32 %v1956, 1.442695
    %v2007 = vpow.pop %v2006
    %v2008 = vmul.f32 %v1957, 1.442695
    %v2009 = vpow.pop %v2008
    %v2010 = vmul.f32 %v1958, 1.442695
    %v2011 = vpow.pop %v2010
    %v2012 = vmul.f32 %v1959, 1.442695
    %v2013 = vpow.pop %v2012
    %v2014 = vmul.f32 %v1960, 1.442695
    %v2015 = vpow.pop %v2014
    %v2016 = vmul.f32 %v1961, 1.442695
    %v2017 = vpow.pop %v2016
    %v2018 = vmul.f32 %v1962, 1.442695
    %v2019 = vpow.pop %v2018
    %v2020 = vmul.f32 %v1963, 1.442695
    %v2021 = vpow.pop %v2020
    %v2022 = vmul.f32 %v1964, 1.442695
    %v2023 = vpow.pop %v2022
    %v2024 = vmul.f32 %v1965, 1.442695
    %v2025 = vpow.pop %v2024
    %v2026 = vmul.f32 %v1966, 1.442695
    %v2027 = vpow.pop %v2026
    %v2028 = vmul.f32 %v1967, 1.442695
    %v2029 = vpow.pop %v2028
    %v2030 = vmul.f32 %v1968, 1.442695
    %v2031 = vpow.pop %v2030
    %v2032 = vmul.f32 %v1969, 1.442695
    %v2033 = vpow.pop %v2032
    %v2034 = vsel %vm505, %v1971, 0.0
    %v2035 = vsel %vm505, %v1975, 0.0
    %v2036 = vadd.f32 %v2034, %v2035
    %v2037 = vsel %vm505, %v1979, 0.0
    %v2038 = vadd.f32 %v2036, %v2037
    %v2039 = vsel %vm505, %v1983, 0.0
    %v2040 = vadd.f32 %v2038, %v2039
    %v2041 = vsel %vm505, %v1987, 0.0
    %v2042 = vadd.f32 %v2040, %v2041
    %v2043 = vsel %vm505, %v1991, 0.0
    %v2044 = vadd.f32 %v2042, %v2043
    %v2045 = vsel %vm505, %v1995, 0.0
    %v2046 = vadd.f32 %v2044, %v2045
    %v2047 = vsel %vm505, %v1999, 0.0
    %v2048 = vadd.f32 %v2046, %v2047
    %v2049 = vsel %vm505, %v2003, 0.0
    %v2050 = vadd.f32 %v2048, %v2049
    %v2051 = vsel %vm505, %v2007, 0.0
    %v2052 = vadd.f32 %v2050, %v2051
    %v2053 = vsel %vm505, %v2011, 0.0
    %v2054 = vadd.f32 %v2052, %v2053
    %v2055 = vsel %vm505, %v2015, 0.0
    %v2056 = vadd.f32 %v2054, %v2055
    %v2057 = vsel %vm505, %v2019, 0.0
    %v2058 = vadd.f32 %v2056, %v2057
    %v2059 = vsel %vm505, %v2023, 0.0
    %v2060 = vadd.f32 %v2058, %v2059
    %v2061 = vsel %vm505, %v2027, 0.0
    %v2062 = vadd.f32 %v2060, %v2061
    %v2063 = vsel %vm505, %v2031, 0.0
    %v2064 = vadd.f32 %v2062, %v2063
    %v2065 = vsel %vm505, %v1973, 0.0
    %v2066 = vsel %vm505, %v1977, 0.0
    %v2067 = vadd.f32 %v2065, %v2066
    %v2068 = vsel %vm505, %v1981, 0.0
    %v2069 = vadd.f32 %v2067, %v2068
    %v2070 = vsel %vm505, %v1985, 0.0
    %v2071 = vadd.f32 %v2069, %v2070
    %v2072 = vsel %vm505, %v1989, 0.0
    %v2073 = vadd.f32 %v2071, %v2072
    %v2074 = vsel %vm505, %v1993, 0.0
    %v2075 = vadd.f32 %v2073, %v2074
    %v2076 = vsel %vm505, %v1997, 0.0
    %v2077 = vadd.f32 %v2075, %v2076
    %v2078 = vsel %vm505, %v2001, 0.0
    %v2079 = vadd.f32 %v2077, %v2078
    %v2080 = vsel %vm505, %v2005, 0.0
    %v2081 = vadd.f32 %v2079, %v2080
    %v2082 = vsel %vm505, %v2009, 0.0
    %v2083 = vadd.f32 %v2081, %v2082
    %v2084 = vsel %vm505, %v2013, 0.0
    %v2085 = vadd.f32 %v2083, %v2084
    %v2086 = vsel %vm505, %v2017, 0.0
    %v2087 = vadd.f32 %v2085, %v2086
    %v2088 = vsel %vm505, %v2021, 0.0
    %v2089 = vadd.f32 %v2087, %v2088
    %v2090 = vsel %vm505, %v2025, 0.0
    %v2091 = vadd.f32 %v2089, %v2090
    %v2092 = vsel %vm505, %v2029, 0.0
    %v2093 = vadd.f32 %v2091, %v2092
    %v2094 = vsel %vm505, %v2033, 0.0
    %v2095 = vadd.f32 %v2093, %v2094
    %v2096 = vrcp.pop %v2064
    %v2097 = vrcp.pop %v2095
    %v2098 = vmul.f32 %v1971, %v2096
    %v2099 = vmul.f32 %v1973, %v2097
    %v2100 = vmul.f32 %v1975, %v2096
    %v2101 = vmul.f32 %v1977, %v2097
    %v2102 = vmul.f32 %v1979, %v2096
    %v2103 = vmul.f32 %v1981, %v2097
    %v2104 = vmul.f32 %v1983, %v2096
    %v2105 = vmul.f32 %v1985, %v2097
    %v2106 = vmul.f32 %v1987, %v2096
    %v2107 = vmul.f32 %v1989, %v2097
    %v2108 = vmul.f32 %v1991, %v2096
    %v2109 = vmul.f32 %v1993, %v2097
    %v2110 = vmul.f32 %v1995, %v2096
    %v2111 = vmul.f32 %v1997, %v2097
    %v2112 = vmul.f32 %v1999, %v2096
    %v2113 = vmul.f32 %v2001, %v2097
    %v2114 = vmul.f32 %v2003, %v2096
    %v2115 = vmul.f32 %v2005, %v2097
    %v2116 = vmul.f32 %v2007, %v2096
    %v2117 = vmul.f32 %v2009, %v2097
    %v2118 = vmul.f32 %v2011, %v2096
    %v2119 = vmul.f32 %v2013, %v2097
    %v2120 = vmul.f32 %v2015, %v2096
    %v2121 = vmul.f32 %v2017, %v2097
    %v2122 = vmul.f32 %v2019, %v2096
    %v2123 = vmul.f32 %v2021, %v2097
    %v2124 = vmul.f32 %v2023, %v2096
    %v2125 = vmul.f32 %v2025, %v2097
    %v2126 = vmul.f32 %v2027, %v2096
    %v2127 = vmul.f32 %v2029, %v2097
    %v2128 = vmul.f32 %v2031, %v2096
    %v2129 = vmul.f32 %v2033, %v2097
    %v2132 = vcombine.high %v285, %v285
    %v2134 = vunpack.c.l.s4 1966171168
    %v2135 = vunpack.c.0.s8 %v2134
    %v2136 = vlaneseq
    %v2137 = vshrl.u32 %v2136, 7
    %v2138 = vsub.s32 %v2135, %v2137
    %v2139 = vrot.slane %v285, %v2138
    %v2141 = vunpack.c.l.s4 1966171168
    %v2142 = vunpack.c.0.s8 %v2141
    %v2143 = vlaneseq
    %v2144 = vshrl.u32 %v2143, 7
    %v2145 = vsub.s32 %v2142, %v2144
    %v2146 = vrot.slane %v2132, %v2145
    %v2147 = vcombine.high %v2139, %v2139
    %v2148 = vcombine.high %v2146, %v2146
    %v2150 = vunpack.c.l.s4 1966171168
    %v2151 = vunpack.c.0.s8 %v2150
    %v2152 = vlaneseq
    %v2153 = vshrl.u32 %v2152, 7
    %v2154 = vsub.s32 %v2151, %v2153
    %v2155 = vrot.slane %v2139, %v2154
    %v2157 = vunpack.c.l.s4 1966171168
    %v2158 = vunpack.c.0.s8 %v2157
    %v2159 = vlaneseq
    %v2160 = vshrl.u32 %v2159, 7
    %v2161 = vsub.s32 %v2158, %v2160
    %v2162 = vrot.slane %v2146, %v2161
    %v2164 = vunpack.c.l.s4 1966171168
    %v2165 = vunpack.c.0.s8 %v2164
    %v2166 = vlaneseq
    %v2167 = vshrl.u32 %v2166, 7
    %v2168 = vsub.s32 %v2165, %v2167
    %v2169 = vrot.slane %v2147, %v2168
    %v2171 = vunpack.c.l.s4 1966171168
    %v2172 = vunpack.c.0.s8 %v2171
    %v2173 = vlaneseq
    %v2174 = vshrl.u32 %v2173, 7
    %v2175 = vsub.s32 %v2172, %v2174
    %v2176 = vrot.slane %v2148, %v2175
    %v2177 = vcombine.high %v2155, %v2155
    %v2178 = vcombine.high %v2162, %v2162
    %v2179 = vcombine.high %v2169, %v2169
    %v2180 = vcombine.high %v2176, %v2176
    %v2181 = vcombine.high %v290, %v290
    %v2183 = vunpack.c.l.s4 1966171168
    %v2184 = vunpack.c.0.s8 %v2183
    %v2185 = vlaneseq
    %v2186 = vshrl.u32 %v2185, 7
    %v2187 = vsub.s32 %v2184, %v2186
    %v2188 = vrot.slane %v290, %v2187
    %v2190 = vunpack.c.l.s4 1966171168
    %v2191 = vunpack.c.0.s8 %v2190
    %v2192 = vlaneseq
    %v2193 = vshrl.u32 %v2192, 7
    %v2194 = vsub.s32 %v2191, %v2193
    %v2195 = vrot.slane %v2181, %v2194
    %v2196 = vcombine.high %v2188, %v2188
    %v2197 = vcombine.high %v2195, %v2195
    %v2199 = vunpack.c.l.s4 1966171168
    %v2200 = vunpack.c.0.s8 %v2199
    %v2201 = vlaneseq
    %v2202 = vshrl.u32 %v2201, 7
    %v2203 = vsub.s32 %v2200, %v2202
    %v2204 = vrot.slane %v2188, %v2203
    %v2206 = vunpack.c.l.s4 1966171168
    %v2207 = vunpack.c.0.s8 %v2206
    %v2208 = vlaneseq
    %v2209 = vshrl.u32 %v2208, 7
    %v2210 = vsub.s32 %v2207, %v2209
    %v2211 = vrot.slane %v2195, %v2210
    %v2213 = vunpack.c.l.s4 1966171168
    %v2214 = vunpack.c.0.s8 %v2213
    %v2215 = vlaneseq
    %v2216 = vshrl.u32 %v2215, 7
    %v2217 = vsub.s32 %v2214, %v2216
    %v2218 = vrot.slane %v2196, %v2217
    %v2220 = vunpack.c.l.s4 1966171168
    %v2221 = vunpack.c.0.s8 %v2220
    %v2222 = vlaneseq
    %v2223 = vshrl.u32 %v2222, 7
    %v2224 = vsub.s32 %v2221, %v2223
    %v2225 = vrot.slane %v2197, %v2224
    %v2226 = vcombine.high %v2204, %v2204
    %v2227 = vcombine.high %v2211, %v2211
    %v2228 = vcombine.high %v2218, %v2218
    %v2229 = vcombine.high %v2225, %v2225
    %v2230 = vlaneseq
    %v2231 = vshrl.u32 %v2230, 7
    %v2232 = vsub.s32 0, %v2231
    %v2233 = vrot.slane %v2155, %v2232
    %v2234 = vlaneseq
    %v2235 = vshrl.u32 %v2234, 7
    %v2236 = vsub.s32 0, %v2235
    %v2237 = vrot.slane %v2169, %v2236
    %v2238 = vlaneseq
    %v2239 = vshrl.u32 %v2238, 7
    %v2240 = vsub.s32 0, %v2239
    %v2241 = vrot.slane %v2177, %v2240
    %v2242 = vlaneseq
    %v2243 = vshrl.u32 %v2242, 7
    %v2244 = vsub.s32 0, %v2243
    %v2245 = vrot.slane %v2179, %v2244
    %v2246 = vlaneseq
    %v2247 = vshrl.u32 %v2246, 7
    %v2248 = vsub.s32 0, %v2247
    %v2249 = vrot.slane %v2162, %v2248
    %v2250 = vlaneseq
    %v2251 = vshrl.u32 %v2250, 7
    %v2252 = vsub.s32 0, %v2251
    %v2253 = vrot.slane %v2176, %v2252
    %v2254 = vlaneseq
    %v2255 = vshrl.u32 %v2254, 7
    %v2256 = vsub.s32 0, %v2255
    %v2257 = vrot.slane %v2178, %v2256
    %v2258 = vlaneseq
    %v2259 = vshrl.u32 %v2258, 7
    %v2260 = vsub.s32 0, %v2259
    %v2261 = vrot.slane %v2180, %v2260
    %v2262 = vlaneseq
    %v2263 = vshrl.u32 %v2262, 7
    %v2264 = vsub.s32 0, %v2263
    %v2265 = vrot.slane %v2204, %v2264
    %v2266 = vlaneseq
    %v2267 = vshrl.u32 %v2266, 7
    %v2268 = vsub.s32 0, %v2267
    %v2269 = vrot.slane %v2218, %v2268
    %v2270 = vlaneseq
    %v2271 = vshrl.u32 %v2270, 7
    %v2272 = vsub.s32 0, %v2271
    %v2273 = vrot.slane %v2226, %v2272
    %v2274 = vlaneseq
    %v2275 = vshrl.u32 %v2274, 7
    %v2276 = vsub.s32 0, %v2275
    %v2277 = vrot.slane %v2228, %v2276
    %v2278 = vlaneseq
    %v2279 = vshrl.u32 %v2278, 7
    %v2280 = vsub.s32 0, %v2279
    %v2281 = vrot.slane %v2211, %v2280
    %v2282 = vlaneseq
    %v2283 = vshrl.u32 %v2282, 7
    %v2284 = vsub.s32 0, %v2283
    %v2285 = vrot.slane %v2225, %v2284
    %v2286 = vlaneseq
    %v2287 = vshrl.u32 %v2286, 7
    %v2288 = vsub.s32 0, %v2287
    %v2289 = vrot.slane %v2227, %v2288
    %v2290 = vlaneseq
    %v2291 = vshrl.u32 %v2290, 7
    %v2292 = vsub.s32 0, %v2291
    %v2293 = vrot.slane %v2229, %v2292
    %v2310 = vmul.f32 %v2098, %v2233
    %v2311 = vmul.f32 %v2099, %v2233
    %v2312 = vmul.f32 %v2100, %v2237
    %v2313 = vmul.f32 %v2101, %v2237
    %v2314 = vmul.f32 %v2102, %v2241
    %v2315 = vmul.f32 %v2103, %v2241
    %v2316 = vmul.f32 %v2104, %v2245
    %v2317 = vmul.f32 %v2105, %v2245
    %v2318 = vmul.f32 %v2106, %v2249
    %v2319 = vmul.f32 %v2107, %v2249
    %v2320 = vmul.f32 %v2108, %v2253
    %v2321 = vmul.f32 %v2109, %v2253
    %v2322 = vmul.f32 %v2110, %v2257
    %v2323 = vmul.f32 %v2111, %v2257
    %v2324 = vmul.f32 %v2112, %v2261
    %v2325 = vmul.f32 %v2113, %v2261
    %v2326 = vmul.f32 %v2114, %v2265
    %v2327 = vmul.f32 %v2115, %v2265
    %v2328 = vmul.f32 %v2116, %v2269
    %v2329 = vmul.f32 %v2117, %v2269
    %v2330 = vmul.f32 %v2118, %v2273
    %v2331 = vmul.f32 %v2119, %v2273
    %v2332 = vmul.f32 %v2120, %v2277
    %v2333 = vmul.f32 %v2121, %v2277
    %v2334 = vmul.f32 %v2122, %v2281
    %v2335 = vmul.f32 %v2123, %v2281
    %v2336 = vmul.f32 %v2124, %v2285
    %v2337 = vmul.f32 %v2125, %v2285
    %v2338 = vmul.f32 %v2126, %v2289
    %v2339 = vmul.f32 %v2127, %v2289
    %v2340 = vmul.f32 %v2128, %v2293
    %v2341 = vmul.f32 %v2129, %v2293
    %v2342 = vsel %vm505, %v2310, 0.0
    %v2343 = vsel %vm505, %v2312, 0.0
    %v2344 = vadd.f32 %v2342, %v2343
    %v2345 = vsel %vm505, %v2314, 0.0
    %v2346 = vadd.f32 %v2344, %v2345
    %v2347 = vsel %vm505, %v2316, 0.0
    %v2348 = vadd.f32 %v2346, %v2347
    %v2349 = vsel %vm505, %v2318, 0.0
    %v2350 = vadd.f32 %v2348, %v2349
    %v2351 = vsel %vm505, %v2320, 0.0
    %v2352 = vadd.f32 %v2350, %v2351
    %v2353 = vsel %vm505, %v2322, 0.0
    %v2354 = vadd.f32 %v2352, %v2353
    %v2355 = vsel %vm505, %v2324, 0.0
    %v2356 = vadd.f32 %v2354, %v2355
    %v2357 = vsel %vm505, %v2326, 0.0
    %v2358 = vadd.f32 %v2356, %v2357
    %v2359 = vsel %vm505, %v2328, 0.0
    %v2360 = vadd.f32 %v2358, %v2359
    %v2361 = vsel %vm505, %v2330, 0.0
    %v2362 = vadd.f32 %v2360, %v2361
    %v2363 = vsel %vm505, %v2332, 0.0
    %v2364 = vadd.f32 %v2362, %v2363
    %v2365 = vsel %vm505, %v2334, 0.0
    %v2366 = vadd.f32 %v2364, %v2365
    %v2367 = vsel %vm505, %v2336, 0.0
    %v2368 = vadd.f32 %v2366, %v2367
    %v2369 = vsel %vm505, %v2338, 0.0
    %v2370 = vadd.f32 %v2368, %v2369
    %v2371 = vsel %vm505, %v2340, 0.0
    %v2372 = vadd.f32 %v2370, %v2371
    %v2373 = vsel %vm505, %v2311, 0.0
    %v2374 = vsel %vm505, %v2313, 0.0
    %v2375 = vadd.f32 %v2373, %v2374
    %v2376 = vsel %vm505, %v2315, 0.0
    %v2377 = vadd.f32 %v2375, %v2376
    %v2378 = vsel %vm505, %v2317, 0.0
    %v2379 = vadd.f32 %v2377, %v2378
    %v2380 = vsel %vm505, %v2319, 0.0
    %v2381 = vadd.f32 %v2379, %v2380
    %v2382 = vsel %vm505, %v2321, 0.0
    %v2383 = vadd.f32 %v2381, %v2382
    %v2384 = vsel %vm505, %v2323, 0.0
    %v2385 = vadd.f32 %v2383, %v2384
    %v2386 = vsel %vm505, %v2325, 0.0
    %v2387 = vadd.f32 %v2385, %v2386
    %v2388 = vsel %vm505, %v2327, 0.0
    %v2389 = vadd.f32 %v2387, %v2388
    %v2390 = vsel %vm505, %v2329, 0.0
    %v2391 = vadd.f32 %v2389, %v2390
    %v2392 = vsel %vm505, %v2331, 0.0
    %v2393 = vadd.f32 %v2391, %v2392
    %v2394 = vsel %vm505, %v2333, 0.0
    %v2395 = vadd.f32 %v2393, %v2394
    %v2396 = vsel %vm505, %v2335, 0.0
    %v2397 = vadd.f32 %v2395, %v2396
    %v2398 = vsel %vm505, %v2337, 0.0
    %v2399 = vadd.f32 %v2397, %v2398
    %v2400 = vsel %vm505, %v2339, 0.0
    %v2401 = vadd.f32 %v2399, %v2400
    %v2402 = vsel %vm505, %v2341, 0.0
    %v2403 = vadd.f32 %v2401, %v2402
    %v2404 = vld [vmem:[%s3 + $0x10] sm:$0xff]
    %v2405 = vld [vmem:[%s3 + $0x18] sm:$0xff]
    %v2406 = vld [vmem:[%s4 + $0x10] sm:$0xff]
    %v2407 = vld [vmem:[%s4 + $0x18] sm:$0xff]
    %2409 = vset.pattern.permute.xlu0 0
    %2410 = vperm.xlu0 %2409, %v2406
    %v2411 = vpop.permute.xlu0 %2410
    %2414 = vset.pattern.permute.xlu0 0
    %2415 = vperm.xlu0 %2414, %v2407
    %v2416 = vpop.permute.xlu0 %2415
    %v2419 = vsel %vm131, %v2404, 0
    %v2422 = vsel %vm131, %v2405, 0
    %2424 = vmatprep.subr.mxu0 0.0
    %2425 = vmatpush1.msra.mxu0 %v2372
    %2426 = vmatprep.subr.mxu0 0.0
    %2427 = vmatpush1.msra.mxu0 %v2403
    %2428 = vmatprep.subr.mxu0 0.0
    %2429 = vmatpush1.msra.mxu0 0.0
    %2430 = vmatprep.subr.mxu0 0.0
    %2431 = vmatpush1.msra.mxu0 0.0
    %2432 = vmatprep.subr.mxu0 0.0
    %2433 = vmatpush1.msra.mxu0 0.0
    %2434 = vmatprep.subr.mxu0 0.0
    %2435 = vmatpush1.msra.mxu0 0.0
    %2436 = vmatprep.subr.mxu0 0.0
    %2437 = vmatpush1.msra.mxu0 0.0
    %2438 = vmatprep.subr.mxu0 0.0
    %2439 = vmatpush1.msra.mxu0 0.0
    %2440 = vmatprep.subr.mxu0 0.0
    %2441 = vmatpush1.msra.mxu0 0.0
    %2442 = vmatprep.subr.mxu0 0.0
    %2443 = vmatpush1.msra.mxu0 0.0
    %2444 = vmatprep.subr.mxu0 0.0
    %2445 = vmatpush1.msra.mxu0 0.0
    %2446 = vmatprep.subr.mxu0 0.0
    %2447 = vmatpush1.msra.mxu0 0.0
    %2448 = vmatprep.subr.mxu0 0.0
    %2449 = vmatpush1.msra.mxu0 0.0
    %2450 = vmatprep.subr.mxu0 0.0
    %2451 = vmatpush1.msra.mxu0 0.0
    %2452 = vmatprep.subr.mxu0 0.0
    %2453 = vmatpush1.msra.mxu0 0.0
    %2454 = vmatprep.subr.mxu0 0.0
    %2455 = vmatpush1.msra.mxu0 0.0
    %2456 = vmatprep.subr.mxu0 0.0
    %2457 = vmatpush1.msra.mxu0 0.0
    %2458 = vmatprep.subr.mxu0 0.0
    %2459 = vmatpush1.msra.mxu0 0.0
    %2460 = vmatprep.subr.mxu0 0.0
    %2461 = vmatpush1.msra.mxu0 0.0
    %2462 = vmatprep.subr.mxu0 0.0
    %2463 = vmatpush1.msra.mxu0 0.0
    %2464 = vmatprep.subr.mxu0 0.0
    %2465 = vmatpush1.msra.mxu0 0.0
    %2466 = vmatprep.subr.mxu0 0.0
    %2467 = vmatpush1.msra.mxu0 0.0
    %2468 = vmatprep.subr.mxu0 0.0
    %2469 = vmatpush1.msra.mxu0 0.0
    %2470 = vmatprep.subr.mxu0 0.0
    %2471 = vmatpush1.msra.mxu0 0.0
    %2472 = vmatprep.subr.mxu0 0.0
    %2473 = vmatpush1.msra.mxu0 0.0
    %2474 = vmatprep.subr.mxu0 0.0
    %2475 = vmatpush1.msra.mxu0 0.0
    %2476 = vmatprep.subr.mxu0 0.0
    %2477 = vmatpush1.msra.mxu0 0.0
    %2478 = vmatprep.subr.mxu0 0.0
    %2479 = vmatpush1.msra.mxu0 0.0
    %2480 = vmatprep.subr.mxu0 0.0
    %2481 = vmatpush1.msra.mxu0 0.0
    %2482 = vmatprep.subr.mxu0 0.0
    %2483 = vmatpush1.msra.mxu0 0.0
    %2484 = vmatprep.subr.mxu0 0.0
    %2485 = vmatpush1.msra.mxu0 0.0
    %2486 = vmatprep.subr.mxu0 0.0
    %2487 = vmatpush1.msra.mxu0 0.0
    %2488 = vmatprep.mubr.f32.mxu0 0.0
    %2489 = vmatmul.mubr.f32.gmra.mrb[0].mxu0 %v2419
    %v2490 = vpop.f32.mrb[0].mxu0
    %v2491 = vadd.f32 %v2411, %v2490
    %v2492 = vpop.f32.mrb[0].mxu0
    %2493 = vmatprep.mubr.f32.mxu0 0.0
    %2494 = vmatmul.mubr.f32.gmra.mrb[0].mxu0 %v2422
    %v2495 = vpop.f32.mrb[0].mxu0
    %v2496 = vadd.f32 %v2416, %v2495
    %v2497 = vpop.f32.mrb[0].mxu0
    %2498 = vdwg.mxu0
    %v2499 = vld [vmem:[%s5] sm:$0xff]
    %v2500 = vld [vmem:[%s5 + $0x8] sm:$0xff]
    %v2501 = vld [vmem:[%s5 + $0x10] sm:$0xff]
    %v2502 = vld [vmem:[%s5 + $0x18] sm:$0xff]
    %v2503 = vld [vmem:[%s5 + $0x20] sm:$0xff]
    %v2504 = vld [vmem:[%s5 + $0x28] sm:$0xff]
    %v2505 = vld [vmem:[%s5 + $0x30] sm:$0xff]
    %v2506 = vld [vmem:[%s5 + $0x38] sm:$0xff]
    %v2507 = vld [vmem:[%s5 + $0x40] sm:$0xff]
    %v2508 = vld [vmem:[%s5 + $0x48] sm:$0xff]
    %v2509 = vld [vmem:[%s6] sm:$0xff]
    %v2510 = vld [vmem:[%s6 + $0x8] sm:$0xff]
    %v2511 = vld [vmem:[%s6 + $0x10] sm:$0xff]
    %v2512 = vld [vmem:[%s6 + $0x18] sm:$0xff]
    %v2513 = vld [vmem:[%s6 + $0x20] sm:$0xff]
    %v2514 = vld [vmem:[%s6 + $0x28] sm:$0xff]
    %v2515 = vld [vmem:[%s6 + $0x30] sm:$0xff]
    %v2516 = vld [vmem:[%s6 + $0x38] sm:$0xff]
    %v2517 = vld [vmem:[%s6 + $0x40] sm:$0xff]
    %v2518 = vld [vmem:[%s6 + $0x48] sm:$0xff]
    %2520 = vset.pattern.permute.xlu0 0
    %2521 = vperm.xlu0 %2520, %v2509
    %v2522 = vpop.permute.xlu0 %2521
    %2525 = vset.pattern.permute.xlu0 0
    %2526 = vperm.xlu0 %2525, %v2510
    %v2527 = vpop.permute.xlu0 %2526
    %2530 = vset.pattern.permute.xlu0 0
    %2531 = vperm.xlu0 %2530, %v2511
    %v2532 = vpop.permute.xlu0 %2531
    %2535 = vset.pattern.permute.xlu0 0
    %2536 = vperm.xlu0 %2535, %v2512
    %v2537 = vpop.permute.xlu0 %2536
    %2540 = vset.pattern.permute.xlu0 0
    %2541 = vperm.xlu0 %2540, %v2513
    %v2542 = vpop.permute.xlu0 %2541
    %2545 = vset.pattern.permute.xlu0 0
    %2546 = vperm.xlu0 %2545, %v2514
    %v2547 = vpop.permute.xlu0 %2546
    %2550 = vset.pattern.permute.xlu0 0
    %2551 = vperm.xlu0 %2550, %v2515
    %v2552 = vpop.permute.xlu0 %2551
    %2555 = vset.pattern.permute.xlu0 0
    %2556 = vperm.xlu0 %2555, %v2516
    %v2557 = vpop.permute.xlu0 %2556
    %2560 = vset.pattern.permute.xlu0 0
    %2561 = vperm.xlu0 %2560, %v2517
    %v2562 = vpop.permute.xlu0 %2561
    %2565 = vset.pattern.permute.xlu0 0
    %2566 = vperm.xlu0 %2565, %v2518
    %v2567 = vpop.permute.xlu0 %2566
    %v2570 = vsel %vm131, %v2499, 0
    %v2573 = vsel %vm131, %v2500, 0
    %v2576 = vsel %vm131, %v2501, 0
    %v2579 = vsel %vm131, %v2502, 0
    %v2582 = vsel %vm131, %v2503, 0
    %v2585 = vsel %vm131, %v2504, 0
    %v2588 = vsel %vm131, %v2505, 0
    %v2591 = vsel %vm131, %v2506, 0
    %v2594 = vsel %vm131, %v2507, 0
    %v2597 = vsel %vm131, %v2508, 0
    %2599 = vmatprep.subr.mxu0 0.0
    %2600 = vmatpush1.msra.mxu0 %v2491
    %2601 = vmatprep.subr.mxu0 0.0
    %2602 = vmatpush1.msra.mxu0 %v2496
    %2603 = vmatprep.subr.mxu0 0.0
    %2604 = vmatpush1.msra.mxu0 0.0
    %2605 = vmatprep.subr.mxu0 0.0
    %2606 = vmatpush1.msra.mxu0 0.0
    %2607 = vmatprep.subr.mxu0 0.0
    %2608 = vmatpush1.msra.mxu0 0.0
    %2609 = vmatprep.subr.mxu0 0.0
    %2610 = vmatpush1.msra.mxu0 0.0
    %2611 = vmatprep.subr.mxu0 0.0
    %2612 = vmatpush1.msra.mxu0 0.0
    %2613 = vmatprep.subr.mxu0 0.0
    %2614 = vmatpush1.msra.mxu0 0.0
    %2615 = vmatprep.subr.mxu0 0.0
    %2616 = vmatpush1.msra.mxu0 0.0
    %2617 = vmatprep.subr.mxu0 0.0
    %2618 = vmatpush1.msra.mxu0 0.0
    %2619 = vmatprep.subr.mxu0 0.0
    %2620 = vmatpush1.msra.mxu0 0.0
    %2621 = vmatprep.subr.mxu0 0.0
    %2622 = vmatpush1.msra.mxu0 0.0
    %2623 = vmatprep.subr.mxu0 0.0
    %2624 = vmatpush1.msra.mxu0 0.0
    %2625 = vmatprep.subr.mxu0 0.0
    %2626 = vmatpush1.msra.mxu0 0.0
    %2627 = vmatprep.subr.mxu0 0.0
    %2628 = vmatpush1.msra.mxu0 0.0
    %2629 = vmatprep.subr.mxu0 0.0
    %2630 = vmatpush1.msra.mxu0 0.0
    %2631 = vmatprep.subr.mxu0 0.0
    %2632 = vmatpush1.msra.mxu0 0.0
    %2633 = vmatprep.subr.mxu0 0.0
    %2634 = vmatpush1.msra.mxu0 0.0
    %2635 = vmatprep.subr.mxu0 0.0
    %2636 = vmatpush1.msra.mxu0 0.0
    %2637 = vmatprep.subr.mxu0 0.0
    %2638 = vmatpush1.msra.mxu0 0.0
    %2639 = vmatprep.subr.mxu0 0.0
    %2640 = vmatpush1.msra.mxu0 0.0
    %2641 = vmatprep.subr.mxu0 0.0
    %2642 = vmatpush1.msra.mxu0 0.0
    %2643 = vmatprep.subr.mxu0 0.0
    %2644 = vmatpush1.msra.mxu0 0.0
    %2645 = vmatprep.subr.mxu0 0.0
    %2646 = vmatpush1.msra.mxu0 0.0
    %2647 = vmatprep.subr.mxu0 0.0
    %2648 = vmatpush1.msra.mxu0 0.0
    %2649 = vmatprep.subr.mxu0 0.0
    %2650 = vmatpush1.msra.mxu0 0.0
    %2651 = vmatprep.subr.mxu0 0.0
    %2652 = vmatpush1.msra.mxu0 0.0
    %2653 = vmatprep.subr.mxu0 0.0
    %2654 = vmatpush1.msra.mxu0 0.0
    %2655 = vmatprep.subr.mxu0 0.0
    %2656 = vmatpush1.msra.mxu0 0.0
    %2657 = vmatprep.subr.mxu0 0.0
    %2658 = vmatpush1.msra.mxu0 0.0
    %2659 = vmatprep.subr.mxu0 0.0
    %2660 = vmatpush1.msra.mxu0 0.0
    %2661 = vmatprep.subr.mxu0 0.0
    %2662 = vmatpush1.msra.mxu0 0.0
    %2663 = vmatprep.mubr.f32.mxu0 0.0
    %2664 = vmatmul.mubr.f32.gmra.mrb[0].mxu0 %v2570
    %v2665 = vpop.f32.mrb[0].mxu0
    %v2666 = vadd.f32 %v2522, %v2665
    %v2667 = vpop.f32.mrb[0].mxu0
    %2668 = vmatprep.mubr.f32.mxu0 0.0
    %2669 = vmatmul.mubr.f32.gmra.mrb[0].mxu0 %v2573
    %v2670 = vpop.f32.mrb[0].mxu0
    %v2671 = vadd.f32 %v2527, %v2670
    %v2672 = vpop.f32.mrb[0].mxu0
    %2673 = vmatprep.mubr.f32.mxu0 0.0
    %2674 = vmatmul.mubr.f32.gmra.mrb[0].mxu0 %v2576
    %v2675 = vpop.f32.mrb[0].mxu0
    %v2676 = vadd.f32 %v2532, %v2675
    %v2677 = vpop.f32.mrb[0].mxu0
    %2678 = vmatprep.mubr.f32.mxu0 0.0
    %2679 = vmatmul.mubr.f32.gmra.mrb[0].mxu0 %v2579
    %v2680 = vpop.f32.mrb[0].mxu0
    %v2681 = vadd.f32 %v2537, %v2680
    %v2682 = vpop.f32.mrb[0].mxu0
    %2683 = vmatprep.mubr.f32.mxu0 0.0
    %2684 = vmatmul.mubr.f32.gmra.mrb[0].mxu0 %v2582
    %v2685 = vpop.f32.mrb[0].mxu0
    %v2686 = vadd.f32 %v2542, %v2685
    %v2687 = vpop.f32.mrb[0].mxu0
    %2688 = vmatprep.mubr.f32.mxu0 0.0
    %2689 = vmatmul.mubr.f32.gmra.mrb[0].mxu0 %v2585
    %v2690 = vpop.f32.mrb[0].mxu0
    %v2691 = vadd.f32 %v2547, %v2690
    %v2692 = vpop.f32.mrb[0].mxu0
    %2693 = vmatprep.mubr.f32.mxu0 0.0
    %2694 = vmatmul.mubr.f32.gmra.mrb[0].mxu0 %v2588
    %v2695 = vpop.f32.mrb[0].mxu0
    %v2696 = vadd.f32 %v2552, %v2695
    %v2697 = vpop.f32.mrb[0].mxu0
    %2698 = vmatprep.mubr.f32.mxu0 0.0
    %2699 = vmatmul.mubr.f32.gmra.mrb[0].mxu0 %v2591
    %v2700 = vpop.f32.mrb[0].mxu0
    %v2701 = vadd.f32 %v2557, %v2700
    %v2702 = vpop.f32.mrb[0].mxu0
    %2703 = vmatprep.mubr.f32.mxu0 0.0
    %2704 = vmatmul.mubr.f32.gmra.mrb[0].mxu0 %v2594
    %v2705 = vpop.f32.mrb[0].mxu0
    %v2706 = vadd.f32 %v2562, %v2705
    %v2707 = vpop.f32.mrb[0].mxu0
    %2708 = vmatprep.mubr.f32.mxu0 0.0
    %2709 = vmatmul.mubr.f32.gmra.mrb[0].mxu0 %v2597
    %v2710 = vpop.f32.mrb[0].mxu0
    %v2711 = vadd.f32 %v2567, %v2710
    %v2712 = vpop.f32.mrb[0].mxu0
    %2713 = vdwg.mxu0
    %v2714 = vmax.f32 %v2666, 0.0
    %v2715 = vmax.f32 %v2671, 0.0
    %v2716 = vmax.f32 %v2676, 0.0
    %v2717 = vmax.f32 %v2681, 0.0
    %v2718 = vmax.f32 %v2686, 0.0
    %v2719 = vmax.f32 %v2691, 0.0
    %v2720 = vmax.f32 %v2696, 0.0
    %v2721 = vmax.f32 %v2701, 0.0
    %v2722 = vmax.f32 %v2706, 0.0
    %v2723 = vmax.f32 %v2711, 0.0
    %v2724 = vld [vmem:[%s7] sm:$0xff]
    %v2725 = vld [vmem:[%s8] sm:$0xff]
    %2727 = vset.pattern.permute.xlu0 0
    %2728 = vperm.xlu0 %2727, %v2725
    %v2729 = vpop.permute.xlu0 %2728
    %v2732 = vsel %vm1361, %v2724, 0
    %2734 = vmatprep.subr.mxu0 0.0
    %2735 = vmatpush1.msra.mxu0 %v2714
    %2736 = vmatprep.subr.mxu0 0.0
    %2737 = vmatpush1.msra.mxu0 %v2715
    %2738 = vmatprep.subr.mxu0 0.0
    %2739 = vmatpush1.msra.mxu0 %v2716
    %2740 = vmatprep.subr.mxu0 0.0
    %2741 = vmatpush1.msra.mxu0 %v2717
    %2742 = vmatprep.subr.mxu0 0.0
    %2743 = vmatpush1.msra.mxu0 %v2718
    %2744 = vmatprep.subr.mxu0 0.0
    %2745 = vmatpush1.msra.mxu0 %v2719
    %2746 = vmatprep.subr.mxu0 0.0
    %2747 = vmatpush1.msra.mxu0 %v2720
    %2748 = vmatprep.subr.mxu0 0.0
    %2749 = vmatpush1.msra.mxu0 %v2721
    %2750 = vmatprep.subr.mxu0 0.0
    %2751 = vmatpush1.msra.mxu0 %v2722
    %2752 = vmatprep.subr.mxu0 0.0
    %2753 = vmatpush1.msra.mxu0 %v2723
    %2754 = vmatprep.subr.mxu0 0.0
    %2755 = vmatpush1.msra.mxu0 0.0
    %2756 = vmatprep.subr.mxu0 0.0
    %2757 = vmatpush1.msra.mxu0 0.0
    %2758 = vmatprep.subr.mxu0 0.0
    %2759 = vmatpush1.msra.mxu0 0.0
    %2760 = vmatprep.subr.mxu0 0.0
    %2761 = vmatpush1.msra.mxu0 0.0
    %2762 = vmatprep.subr.mxu0 0.0
    %2763 = vmatpush1.msra.mxu0 0.0
    %2764 = vmatprep.subr.mxu0 0.0
    %2765 = vmatpush1.msra.mxu0 0.0
    %2766 = vmatprep.subr.mxu0 0.0
    %2767 = vmatpush1.msra.mxu0 0.0
    %2768 = vmatprep.subr.mxu0 0.0
    %2769 = vmatpush1.msra.mxu0 0.0
    %2770 = vmatprep.subr.mxu0 0.0
    %2771 = vmatpush1.msra.mxu0 0.0
    %2772 = vmatprep.subr.mxu0 0.0
    %2773 = vmatpush1.msra.mxu0 0.0
    %2774 = vmatprep.subr.mxu0 0.0
    %2775 = vmatpush1.msra.mxu0 0.0
    %2776 = vmatprep.subr.mxu0 0.0
    %2777 = vmatpush1.msra.mxu0 0.0
    %2778 = vmatprep.subr.mxu0 0.0
    %2779 = vmatpush1.msra.mxu0 0.0
    %2780 = vmatprep.subr.mxu0 0.0
    %2781 = vmatpush1.msra.mxu0 0.0
    %2782 = vmatprep.subr.mxu0 0.0
    %2783 = vmatpush1.msra.mxu0 0.0
    %2784 = vmatprep.subr.mxu0 0.0
    %2785 = vmatpush1.msra.mxu0 0.0
    %2786 = vmatprep.subr.mxu0 0.0
    %2787 = vmatpush1.msra.mxu0 0.0
    %2788 = vmatprep.subr.mxu0 0.0
    %2789 = vmatpush1.msra.mxu0 0.0
    %2790 = vmatprep.subr.mxu0 0.0
    %2791 = vmatpush1.msra.mxu0 0.0
    %2792 = vmatprep.subr.mxu0 0.0
    %2793 = vmatpush1.msra.mxu0 0.0
    %2794 = vmatprep.subr.mxu0 0.0
    %2795 = vmatpush1.msra.mxu0 0.0
    %2796 = vmatprep.subr.mxu0 0.0
    %2797 = vmatpush1.msra.mxu0 0.0
    %2798 = vmatprep.mubr.f32.mxu0 0.0
    %2799 = vmatmul.mubr.f32.gmra.mrb[0].mxu0 %v2732
    %v2800 = vpop.f32.mrb[0].mxu0
    %v2801 = vadd.f32 %v2729, %v2800
    %v2802 = vpop.f32.mrb[0].mxu0
    %2803 = vdwg.mxu0
    %v2804 = vld [vmem:[%s9] sm:$0xff]
    %v2805 = vld [vmem:[%s9 + $0x8] sm:$0xff]
    %v2806 = vld [vmem:[%s9 + $0x10] sm:$0xff]
    %v2807 = vld [vmem:[%s9 + $0x18] sm:$0xff]
    %v2808 = vld [vmem:[%s9 + $0x20] sm:$0xff]
    %v2809 = vld [vmem:[%s10] sm:$0xff]
    %v2810 = vld [vmem:[%s10 + $0x8] sm:$0xff]
    %v2811 = vld [vmem:[%s10 + $0x10] sm:$0xff]
    %v2812 = vld [vmem:[%s10 + $0x18] sm:$0xff]
    %v2813 = vld [vmem:[%s10 + $0x20] sm:$0xff]
    %2815 = vset.pattern.permute.xlu0 0
    %2816 = vperm.xlu0 %2815, %v2809
    %v2817 = vpop.permute.xlu0 %2816
    %2820 = vset.pattern.permute.xlu0 0
    %2821 = vperm.xlu0 %2820, %v2810
    %v2822 = vpop.permute.xlu0 %2821
    %2825 = vset.pattern.permute.xlu0 0
    %2826 = vperm.xlu0 %2825, %v2811
    %v2827 = vpop.permute.xlu0 %2826
    %2830 = vset.pattern.permute.xlu0 0
    %2831 = vperm.xlu0 %2830, %v2812
    %v2832 = vpop.permute.xlu0 %2831
    %2835 = vset.pattern.permute.xlu0 0
    %2836 = vperm.xlu0 %2835, %v2813
    %v2837 = vpop.permute.xlu0 %2836
    %v2840 = vsel %vm1470, %v2804, 0
    %v2843 = vsel %vm1470, %v2805, 0
    %v2846 = vsel %vm1470, %v2806, 0
    %v2849 = vsel %vm1470, %v2807, 0
    %v2852 = vsel %vm1470, %v2808, 0
    %2854 = vmatprep.subr.mxu0 0.0
    %2855 = vmatpush1.msra.mxu0 %v2801
    %2856 = vmatprep.subr.mxu0 0.0
    %2857 = vmatpush1.msra.mxu0 0.0
    %2858 = vmatprep.subr.mxu0 0.0
    %2859 = vmatpush1.msra.mxu0 0.0
    %2860 = vmatprep.subr.mxu0 0.0
    %2861 = vmatpush1.msra.mxu0 0.0
    %2862 = vmatprep.subr.mxu0 0.0
    %2863 = vmatpush1.msra.mxu0 0.0
    %2864 = vmatprep.subr.mxu0 0.0
    %2865 = vmatpush1.msra.mxu0 0.0
    %2866 = vmatprep.subr.mxu0 0.0
    %2867 = vmatpush1.msra.mxu0 0.0
    %2868 = vmatprep.subr.mxu0 0.0
    %2869 = vmatpush1.msra.mxu0 0.0
    %2870 = vmatprep.subr.mxu0 0.0
    %2871 = vmatpush1.msra.mxu0 0.0
    %2872 = vmatprep.subr.mxu0 0.0
    %2873 = vmatpush1.msra.mxu0 0.0
    %2874 = vmatprep.subr.mxu0 0.0
    %2875 = vmatpush1.msra.mxu0 0.0
    %2876 = vmatprep.subr.mxu0 0.0
    %2877 = vmatpush1.msra.mxu0 0.0
    %2878 = vmatprep.subr.mxu0 0.0
    %2879 = vmatpush1.msra.mxu0 0.0
    %2880 = vmatprep.subr.mxu0 0.0
    %2881 = vmatpush1.msra.mxu0 0.0
    %2882 = vmatprep.subr.mxu0 0.0
    %2883 = vmatpush1.msra.mxu0 0.0
    %2884 = vmatprep.subr.mxu0 0.0
    %2885 = vmatpush1.msra.mxu0 0.0
    %2886 = vmatprep.subr.mxu0 0.0
    %2887 = vmatpush1.msra.mxu0 0.0
    %2888 = vmatprep.subr.mxu0 0.0
    %2889 = vmatpush1.msra.mxu0 0.0
    %2890 = vmatprep.subr.mxu0 0.0
    %2891 = vmatpush1.msra.mxu0 0.0
    %2892 = vmatprep.subr.mxu0 0.0
    %2893 = vmatpush1.msra.mxu0 0.0
    %2894 = vmatprep.subr.mxu0 0.0
    %2895 = vmatpush1.msra.mxu0 0.0
    %2896 = vmatprep.subr.mxu0 0.0
    %2897 = vmatpush1.msra.mxu0 0.0
    %2898 = vmatprep.subr.mxu0 0.0
    %2899 = vmatpush1.msra.mxu0 0.0
    %2900 = vmatprep.subr.mxu0 0.0
    %2901 = vmatpush1.msra.mxu0 0.0
    %2902 = vmatprep.subr.mxu0 0.0
    %2903 = vmatpush1.msra.mxu0 0.0
    %2904 = vmatprep.subr.mxu0 0.0
    %2905 = vmatpush1.msra.mxu0 0.0
    %2906 = vmatprep.subr.mxu0 0.0
    %2907 = vmatpush1.msra.mxu0 0.0
    %2908 = vmatprep.subr.mxu0 0.0
    %2909 = vmatpush1.msra.mxu0 0.0
    %2910 = vmatprep.subr.mxu0 0.0
    %2911 = vmatpush1.msra.mxu0 0.0
    %2912 = vmatprep.subr.mxu0 0.0
    %2913 = vmatpush1.msra.mxu0 0.0
    %2914 = vmatprep.subr.mxu0 0.0
    %2915 = vmatpush1.msra.mxu0 0.0
    %2916 = vmatprep.subr.mxu0 0.0
    %2917 = vmatpush1.msra.mxu0 0.0
    %2918 = vmatprep.mubr.f32.mxu0 0.0
    %2919 = vmatmul.mubr.f32.gmra.mrb[0].mxu0 %v2840
    %v2920 = vpop.f32.mrb[0].mxu0
    %v2921 = vadd.f32 %v2817, %v2920
    %v2922 = vpop.f32.mrb[0].mxu0
    %2923 = vmatprep.mubr.f32.mxu0 0.0
    %2924 = vmatmul.mubr.f32.gmra.mrb[0].mxu0 %v2843
    %v2925 = vpop.f32.mrb[0].mxu0
    %v2926 = vadd.f32 %v2822, %v2925
    %v2927 = vpop.f32.mrb[0].mxu0
    %2928 = vmatprep.mubr.f32.mxu0 0.0
    %2929 = vmatmul.mubr.f32.gmra.mrb[0].mxu0 %v2846
    %v2930 = vpop.f32.mrb[0].mxu0
    %v2931 = vadd.f32 %v2827, %v2930
    %v2932 = vpop.f32.mrb[0].mxu0
    %2933 = vmatprep.mubr.f32.mxu0 0.0
    %2934 = vmatmul.mubr.f32.gmra.mrb[0].mxu0 %v2849
    %v2935 = vpop.f32.mrb[0].mxu0
    %v2936 = vadd.f32 %v2832, %v2935
    %v2937 = vpop.f32.mrb[0].mxu0
    %2938 = vmatprep.mubr.f32.mxu0 0.0
    %2939 = vmatmul.mubr.f32.gmra.mrb[0].mxu0 %v2852
    %v2940 = vpop.f32.mrb[0].mxu0
    %v2941 = vadd.f32 %v2837, %v2940
    %v2942 = vpop.f32.mrb[0].mxu0
    %2943 = vdwg.mxu0
    %v2944 = vmax.f32 %v2921, 0.0
    %v2945 = vmax.f32 %v2926, 0.0
    %v2946 = vmax.f32 %v2931, 0.0
    %v2947 = vmax.f32 %v2936, 0.0
    %v2948 = vmax.f32 %v2941, 0.0
    %v2949 = vld [vmem:[%s11] sm:$0xff]
    %v2950 = vld [vmem:[%s12] sm:$0xff]
    %2952 = vset.pattern.permute.xlu0 0
    %2953 = vperm.xlu0 %2952, %v2950
    %v2954 = vpop.permute.xlu0 %2953
    %v2957 = vsel %vm1588, %v2949, 0
    %2959 = vmatprep.subr.mxu0 0.0
    %2960 = vmatpush1.msra.mxu0 %v2944
    %2961 = vmatprep.subr.mxu0 0.0
    %2962 = vmatpush1.msra.mxu0 %v2945
    %2963 = vmatprep.subr.mxu0 0.0
    %2964 = vmatpush1.msra.mxu0 %v2946
    %2965 = vmatprep.subr.mxu0 0.0
    %2966 = vmatpush1.msra.mxu0 %v2947
    %2967 = vmatprep.subr.mxu0 0.0
    %2968 = vmatpush1.msra.mxu0 %v2948
    %2969 = vmatprep.subr.mxu0 0.0
    %2970 = vmatpush1.msra.mxu0 0.0
    %2971 = vmatprep.subr.mxu0 0.0
    %2972 = vmatpush1.msra.mxu0 0.0
    %2973 = vmatprep.subr.mxu0 0.0
    %2974 = vmatpush1.msra.mxu0 0.0
    %2975 = vmatprep.subr.mxu0 0.0
    %2976 = vmatpush1.msra.mxu0 0.0
    %2977 = vmatprep.subr.mxu0 0.0
    %2978 = vmatpush1.msra.mxu0 0.0
    %2979 = vmatprep.subr.mxu0 0.0
    %2980 = vmatpush1.msra.mxu0 0.0
    %2981 = vmatprep.subr.mxu0 0.0
    %2982 = vmatpush1.msra.mxu0 0.0
    %2983 = vmatprep.subr.mxu0 0.0
    %2984 = vmatpush1.msra.mxu0 0.0
    %2985 = vmatprep.subr.mxu0 0.0
    %2986 = vmatpush1.msra.mxu0 0.0
    %2987 = vmatprep.subr.mxu0 0.0
    %2988 = vmatpush1.msra.mxu0 0.0
    %2989 = vmatprep.subr.mxu0 0.0
    %2990 = vmatpush1.msra.mxu0 0.0
    %2991 = vmatprep.subr.mxu0 0.0
    %2992 = vmatpush1.msra.mxu0 0.0
    %2993 = vmatprep.subr.mxu0 0.0
    %2994 = vmatpush1.msra.mxu0 0.0
    %2995 = vmatprep.subr.mxu0 0.0
    %2996 = vmatpush1.msra.mxu0 0.0
    %2997 = vmatprep.subr.mxu0 0.0
    %2998 = vmatpush1.msra.mxu0 0.0
    %2999 = vmatprep.subr.mxu0 0.0
    %3000 = vmatpush1.msra.mxu0 0.0
    %3001 = vmatprep.subr.mxu0 0.0
    %3002 = vmatpush1.msra.mxu0 0.0
    %3003 = vmatprep.subr.mxu0 0.0
    %3004 = vmatpush1.msra.mxu0 0.0
    %3005 = vmatprep.subr.mxu0 0.0
    %3006 = vmatpush1.msra.mxu0 0.0
    %3007 = vmatprep.subr.mxu0 0.0
    %3008 = vmatpush1.msra.mxu0 0.0
    %3009 = vmatprep.subr.mxu0 0.0
    %3010 = vmatpush1.msra.mxu0 0.0
    %3011 = vmatprep.subr.mxu0 0.0
    %3012 = vmatpush1.msra.mxu0 0.0
    %3013 = vmatprep.subr.mxu0 0.0
    %3014 = vmatpush1.msra.mxu0 0.0
    %3015 = vmatprep.subr.mxu0 0.0
    %3016 = vmatpush1.msra.mxu0 0.0
    %3017 = vmatprep.subr.mxu0 0.0
    %3018 = vmatpush1.msra.mxu0 0.0
    %3019 = vmatprep.subr.mxu0 0.0
    %3020 = vmatpush1.msra.mxu0 0.0
    %3021 = vmatprep.subr.mxu0 0.0
    %3022 = vmatpush1.msra.mxu0 0.0
    %3023 = vmatprep.mubr.f32.mxu0 0.0
    %3024 = vmatmul.mubr.f32.gmra.mrb[0].mxu0 %v2957
    %v3025 = vpop.f32.mrb[0].mxu0
    %v3026 = vadd.f32 %v2954, %v3025
    %v3027 = vpop.f32.mrb[0].mxu0
    %3028 = vdwg.mxu0
    %s3029 = scalar_lea.vmem [#allocation2], 16
    %3030 = vst.msk [vmem:[%s3029] sm:$0xff] %vm505, %v3026
    %3031 = vst.msk [vmem:[%s3029 + $0x8] sm:$0xff] %vm505, %v2801
    // Predicated region
    $region54: #{tpu_custom_call.1} parent=1 // pred_check
      _
    $region55: #{tpu_custom_call.1} parent=1 // pred_check_branch
      %3033 = sbr.rel (0) target = $region57
    $region56: #{tpu_custom_call.1} parent=1 // pred_region
      %s3035 = ssub.s32 512, 512
      %3036 = vsyncadd [#allocation3], %s3035
      %s3037 = sshll.u32 [#allocation2], 4
      %s3038 = int_to_ptr.vmem [resolvable:$true] %s3037
      %3043 = dma.vmem_to_hbm [thread:$0]  %s3038, 512, %s13, [#allocation3], 128, 128, 8
    $region57: #{tpu_custom_call.1} parent=1 // pred_fallthru
      _
    // Predicated region
    $region58: #{tpu_custom_call.1} parent=1 // pred_check
      _
    $region59: #{tpu_custom_call.1} parent=1 // pred_check_branch
      %3045 = sbr.rel (0) target = $region61
    $region60: #{tpu_custom_call.1} parent=1 // pred_region
      %3046 = dma.done [#allocation3], 512
    $region61: #{tpu_custom_call.1} parent=1 // pred_fallthru
      _
    %3047 = vsyncpa [#allocation3], 1

</llo_original>
